<compile_context>
chip_gen: v5e
topology: v5e:2x2
jax: 0.10.0
libtpu: 0.0.40
codegen_flags: <defaults>
</compile_context>

<pallas_src>
import functools

import jax
import jax.numpy as jnp
from jax import lax
from jax.experimental import pallas as pl
from jax.experimental.pallas import tpu as pltpu


# --------------------------------------------------------------------------
# kernel
# --------------------------------------------------------------------------
def _gru_kernel(x_ref, wih_ref, whh_ref, bias_i_ref, b_hn_ref, wfc_ref,
                bfc_ref, out_ref, h_ref, *gi_refs,
                hidden_dim, t_chunk, fuse_gates, unroll):
    """One (batch-tile, time-chunk) grid step of the GRU forward pass.

    x_ref      : (B_TILE, T_CHUNK, D)   compute dtype
    wih_ref    : (D, 3H) fused  | (3, D, H) per-gate   (= W_i*^T, gates r,z,n)
    whh_ref    : (H, 3H) fused  | (3, H, H) per-gate   (= W_h*^T)
    bias_i_ref : (1, 3H) fused  | (3, 1, H) per-gate   [b_ir+b_hr, b_iz+b_hz, b_in]
    b_hn_ref   : (1, H)  f32
    wfc_ref    : (1, H)  f32 ; bfc_ref : (1, 1) f32
    out_ref    : (B_TILE, 1) f32
    h_ref      : (B_TILE, H) f32 VMEM scratch carried across time chunks
    gi_refs    : 1x (Tc, B_TILE, 3H) fused | 3x (Tc, B_TILE, H) per-gate, f32
    """
    H = hidden_dim
    Tc = t_chunk
    Bt = x_ref.shape[0]
    D = x_ref.shape[2]
    cdt = whh_ref.dtype                       # MXU operand dtype (f32 or bf16)

    t_idx = pl.program_id(1)
    last_t = pl.num_programs(1) - 1

    @pl.when(t_idx == 0)
    def _():
        h_ref[...] = jnp.zeros_like(h_ref)

    # ---- hoisted input projection for the whole chunk ----------------------
    # t-leading gi layout: each recurrence step reads a full contiguous
    # (Bt, .) tile instead of a sublane-strided [:, t, :] slice.  The
    # transpose is done once per chunk on the narrow (D-wide) x block, in f32
    # (packed-16-bit sublane shuffles are avoided); MXU operands are then cast
    # back to the compute dtype.
    xt = pltpu.einshape("btd->tbd", x_ref[...].astype(jnp.float32))  # (Tc,Bt,D)
    x2 = xt.reshape(Tc * Bt, D).astype(cdt)
    if fuse_gates:
        gi = jnp.dot(x2, wih_ref[...], preferred_element_type=jnp.float32)
        gi_refs[0][...] = (gi + bias_i_ref[...]).reshape(Tc, Bt, 3 * H)
    else:
        for g in range(3):
            gg = jnp.dot(x2, wih_ref[g], preferred_element_type=jnp.float32)
            gi_refs[g][...] = (gg + bias_i_ref[g]).reshape(Tc, Bt, H)

    b_hn = b_hn_ref[...]                                    # (1, H) f32

    # ---- recurrence: partially-unrolled fori_loop over the chunk -----------
    # TODO(synk): on v6e/v7x the EUP supports bf16 transcendentals; computing
    # r/z/n in bf16 (h and the blend staying f32) would roughly double EUP
    # throughput once the gate GEMMs stop being the bottleneck.
    if fuse_gates:
        whh = whh_ref[...]          # (H, 3H): one fused gate GEMM per step

        def step(t, h):
            hc = h.astype(cdt)
            gh = jnp.dot(hc, whh, preferred_element_type=jnp.float32)  # (Bt,3H)
            gi_t = gi_refs[0][t]                                       # (Bt,3H)
            r = jax.nn.sigmoid(gi_t[:, 0:H] + gh[:, 0:H])
            z = jax.nn.sigmoid(gi_t[:, H:2 * H] + gh[:, H:2 * H])
            n = jnp.tanh(gi_t[:, 2 * H:] + r * (gh[:, 2 * H:] + b_hn))
            return (1.0 - z) * n + z * h
    else:
        # H not a multiple of 128: keep per-gate GEMMs so gate tiles stay
        # lane-aligned (no sub-vreg lane slicing in the loop).
        whh_r, whh_z, whh_n = whh_ref[0], whh_ref[1], whh_ref[2]

        def step(t, h):
            hc = h.astype(cdt)
            gh_r = jnp.dot(hc, whh_r, preferred_element_type=jnp.float32)
            gh_z = jnp.dot(hc, whh_z, preferred_element_type=jnp.float32)
            gh_n = jnp.dot(hc, whh_n, preferred_element_type=jnp.float32)
            r = jax.nn.sigmoid(gi_refs[0][t] + gh_r)
            z = jax.nn.sigmoid(gi_refs[1][t] + gh_z)
            n = jnp.tanh(gi_refs[2][t] + r * (gh_n + b_hn))
            return (1.0 - z) * n + z * h

    h = lax.fori_loop(0, Tc, step, h_ref[...], unroll=unroll)
    h_ref[...] = h

    # ---- final Linear + sigmoid on the last timestep ------------------------
    # VPU multiply + row reduction: a (H, 1) MXU matmul would waste a full
    # weight push for one output column.
    @pl.when(t_idx == last_t)
    def _():
        logits = jnp.sum(h * wfc_ref[...], axis=-1, keepdims=True) + bfc_ref[...]
        out_ref[...] = jax.nn.sigmoid(logits)


# --------------------------------------------------------------------------
# tiling helpers (generation-aware)
# --------------------------------------------------------------------------
def _vmem_capacity_bytes():
    """Physical VMEM per core; falls back to a v7x-safe 64 MiB."""
    try:
        info = pltpu.get_tpu_info()
        for attr in ("vmem_capacity_bytes", "vmem_bytes", "vmem_capacity"):
            v = getattr(info, attr, None)
            if v:
                return int(v)
    except Exception:
        pass
    return 64 * 1024 * 1024


def _pick_batch_tile(B, capacity):
    """Largest multiple-of-8 divisor of B, capped MXU-friendly.  On 2-TC
    parts (v7x, ~64 MiB VMEM) cap so nb >= 2 and both TensorCores get work."""
    two_core = capacity < (96 << 20)
    cap = 128 if two_core else 256    # 256 fills the 2x(256x256) MXU on v6e
    if two_core and B >= 16:
        cap = min(cap, B // 2)
    best = None
    for c in range(8, min(cap, B) + 1, 8):
        if B % c == 0:
            best = c
    return best if best is not None else B


def _time_chunk_candidates(T):
    """Multiple-of-8 divisors of T (descending); fall back to a single full-T
    chunk when T has none (block dim == full dim keeps the BlockSpec legal)."""
    cands = [c for c in range(8, T + 1, 8) if T % c == 0]
    if not cands:
        cands = [T]
    return sorted(cands, reverse=True)


def _vmem_estimate(bt, tc, D, H, x_bytes, w_bytes):
    """VMEM footprint: double-buffered x block + f32 gi scratch +
    double-buffered weights + h scratch + small constants."""
    x_blk = 2 * bt * tc * D * x_bytes
    gi = 3 * tc * bt * H * 4
    wts = 2 * 3 * (D + H) * H * w_bytes
    small = 2 * (5 * H + 2) * 4
    h_s = bt * H * 4
    return x_blk + gi + wts + small + h_s


def _choose_tiling(B, T, D, H, x_bytes, w_bytes, capacity):
    budget = (capacity * 3) // 4                 # headroom below physical VMEM
    budget = max(32 << 20, min(budget, 96 << 20))
    bt = _pick_batch_tile(B, capacity)
    while True:
        for tc in _time_chunk_candidates(T):
            if _vmem_estimate(bt, tc, D, H, x_bytes, w_bytes) <= budget:
                return bt, tc, budget
        nxt = bt // 2
        if bt > 8 and bt % 16 == 0 and B % nxt == 0:
            bt = nxt
            continue
        # TODO(synk): extreme H * B_TILE could still exceed VMEM here; fall
        # back to the smallest legal chunk and let Mosaic report if it cannot fit.
        return bt, _time_chunk_candidates(T)[-1], budget


def _const_spec(shape):
    r = len(shape)
    return pl.BlockSpec(shape, lambda b, t, _r=r: (0,) * _r)


# --------------------------------------------------------------------------
# wrapper
# --------------------------------------------------------------------------
def simple_confidence_gru(x, params, hidden_dim, *, compute_dtype=jnp.float32):
    """x: (B, T, D) float32, batch_first like PyTorch.  Returns (B, 1) f32."""
    B, T, D = x.shape
    H = hidden_dim
    fuse_gates = (H % 128 == 0)       # fused (., 3H) GEMMs only when gate
                                      # slices stay lane-tile aligned

    capacity = _vmem_capacity_bytes()
    w_bytes = jnp.dtype(compute_dtype).itemsize
    B_TILE, T_CHUNK, budget = _choose_tiling(B, T, D, H, w_bytes, w_bytes,
                                             capacity)
    nb, nt = B // B_TILE, T // T_CHUNK
    unroll = max(1, min(T_CHUNK, 8))

    # ---- parameter prep (PyTorch layout: rows ordered [r; z; n]) -----------
    wih_t = params["weight_ih"].T.astype(compute_dtype)      # (D, 3H)
    whh_t = params["weight_hh"].T.astype(compute_dtype)      # (H, 3H)
    bi = params["bias_ih"].astype(jnp.float32)
    bh = params["bias_hh"].astype(jnp.float32)
    b_rz = bi[:2 * H] + bh[:2 * H]            # r/z biases folded into gi
    b_in = bi[2 * H:]                         # n keeps b_in with gi ...
    b_hn = bh[2 * H:].reshape(1, H)           # ... and b_hn inside r*(.) term
    if fuse_gates:
        wih = wih_t                                            # (D, 3H)
        whh = whh_t                                            # (H, 3H)
        bias_i = jnp.concatenate([b_rz, b_in]).reshape(1, 3 * H)
        gi_scratch = [pltpu.VMEM((T_CHUNK, B_TILE, 3 * H), jnp.float32)]
    else:
        wih = wih_t.reshape(D, 3, H).transpose(1, 0, 2)        # (3, D, H)
        whh = whh_t.reshape(H, 3, H).transpose(1, 0, 2)        # (3, H, H)
        bias_i = jnp.concatenate([b_rz, b_in]).reshape(3, 1, H)
        gi_scratch = [pltpu.VMEM((T_CHUNK, B_TILE, H), jnp.float32)
                      for _ in range(3)]
    wfc = params["fc_weight"].reshape(1, H).astype(jnp.float32)
    bfc = params["fc_bias"].reshape(1, 1).astype(jnp.float32)
    x_in = x.astype(compute_dtype)     # bf16 x in HBM halves streamed traffic

    kernel = functools.partial(_gru_kernel, hidden_dim=H, t_chunk=T_CHUNK,
                               fuse_gates=fuse_gates, unroll=unroll)

    # TODO(synk): the constant weight specs still double-buffer by default;
    # single-buffering them (pipeline_mode buffering / one-shot manual DMA)
    # would free 3*(D+H)*H*w_bytes of VMEM for larger chunks on v7x.
    # TODO(synk): for tiny D (e.g. D=4) the projection GEMM runs at K=D and
    # the x tile wastes most lanes; precomputing gi = x @ Wih outside the
    # kernel (streaming lane-dense gi instead of x) is a shape-dependent win.
    out = pl.pallas_call(
        kernel,
        out_shape=jax.ShapeDtypeStruct((B, 1), jnp.float32),
        grid_spec=pltpu.PrefetchScalarGridSpec(
            num_scalar_prefetch=0,
            grid=(nb, nt),
            in_specs=[
                pl.BlockSpec((B_TILE, T_CHUNK, D), lambda b, t: (b, t, 0)),
                _const_spec(wih.shape),
                _const_spec(whh.shape),
                _const_spec(bias_i.shape),
                _const_spec(b_hn.shape),
                _const_spec(wfc.shape),
                _const_spec(bfc.shape),
            ],
            out_specs=pl.BlockSpec((B_TILE, 1), lambda b, t: (b, 0)),
            scratch_shapes=[pltpu.VMEM((B_TILE, H), jnp.float32)] + gi_scratch,
        ),
        compiler_params=pltpu.CompilerParams(
            dimension_semantics=("parallel", "arbitrary"),
            vmem_limit_bytes=int(budget),
        ),
    )(x_in, wih, whh, bias_i, b_hn, wfc, bfc)
    return out


# --------------------------------------------------------------------------
# pure-JAX reference (matches torch.nn.GRU + Linear + sigmoid)
# --------------------------------------------------------------------------
def gru_reference(x, params, hidden_dim):
    H = hidden_dim
    B, T, D = x.shape
    wih_t = params["weight_ih"].T
    whh_t = params["weight_hh"].T
    bih = params["bias_ih"]
    bhh = params["bias_hh"]
    h = jnp.zeros((B, H), jnp.float32)
    for t in range(T):
        gi = x[:, t, :] @ wih_t + bih
        gh = h @ whh_t + bhh
        r = jax.nn.sigmoid(gi[:, 0:H] + gh[:, 0:H])
        z = jax.nn.sigmoid(gi[:, H:2 * H] + gh[:, H:2 * H])
        n = jnp.tanh(gi[:, 2 * H:3 * H] + r * gh[:, 2 * H:3 * H])
        h = (1.0 - z) * n + z * h
    logits = h @ params["fc_weight"].T + params["fc_bias"]
    return jax.nn.sigmoid(logits)


def init_params(key, input_dim, hidden_dim):
    """Deterministic init matching the PyTorch module's parameter shapes."""
    ks = jax.random.split(key, 6)
    bound = 1.0 / jnp.sqrt(hidden_dim)
    u = lambda k, s: jax.random.uniform(k, s, jnp.float32, -bound, bound)
    return {
        "weight_ih": u(ks[0], (3 * hidden_dim, input_dim)),  # [W_ir; W_iz; W_in]
        "weight_hh": u(ks[1], (3 * hidden_dim, hidden_dim)), # [W_hr; W_hz; W_hn]
        "bias_ih":   u(ks[2], (3 * hidden_dim,)),
        "bias_hh":   u(ks[3], (3 * hidden_dim,)),
        "fc_weight": u(ks[4], (1, hidden_dim)),
        "fc_bias":   u(ks[5], (1,)),
    }


if __name__ == "__main__":
    key = jax.random.PRNGKey(0)
    k1, k2, k3, k4 = jax.random.split(key, 4)

    # Config 1: module defaults (hidden_dim=32) -> per-gate (unfused) path.
    B, T, D, H = 2, 8, 4, 32
    x = jax.random.normal(k1, (B, T, D), jnp.float32)
    params = init_params(k2, D, H)
    ref = gru_reference(x, params, H)
    out = jax.block_until_ready(simple_confidence_gru(x, params, H))
    assert out.shape == (B, 1), out.shape
    assert jnp.allclose(out, ref, atol=1e-5, rtol=1e-5), (out, ref)

    # Config 2: H multiple of 128 -> fused-gate GEMM path (f32 and bf16 MXU).
    B2, T2, D2, H2 = 8, 16, 8, 128
    x2 = jax.random.normal(k3, (B2, T2, D2), jnp.float32)
    params2 = init_params(k4, D2, H2)
    ref2 = gru_reference(x2, params2, H2)
    out2 = jax.block_until_ready(simple_confidence_gru(x2, params2, H2))
    assert out2.shape == (B2, 1), out2.shape
    assert jnp.allclose(out2, ref2, atol=1e-5, rtol=1e-5), (out2, ref2)
    out2_bf16 = jax.block_until_ready(
        simple_confidence_gru(x2, params2, H2, compute_dtype=jnp.bfloat16))
    assert out2_bf16.shape == (B2, 1), out2_bf16.shape
    assert jnp.allclose(out2_bf16, ref2, atol=3e-2, rtol=3e-2), (out2_bf16, ref2)

    print("KERNEL_OK")
</pallas_src>

<mosaic_0001>
module attributes {stable_mosaic.version = 11 : i64} {
  func.func @_gru_kernel(%arg0: i32, %arg1: i32, %arg2: memref<2x8x4xf32, #tpu.memory_space<vmem>>, %arg3: memref<3x4x32xf32, #tpu.memory_space<vmem>>, %arg4: memref<3x32x32xf32, #tpu.memory_space<vmem>>, %arg5: memref<3x1x32xf32, #tpu.memory_space<vmem>>, %arg6: memref<1x32xf32, #tpu.memory_space<vmem>>, %arg7: memref<1x32xf32, #tpu.memory_space<vmem>>, %arg8: memref<1x1xf32, #tpu.memory_space<vmem>>, %arg9: memref<2x1xf32, #tpu.memory_space<vmem>>, %arg10: memref<2x32xf32, #tpu.memory_space<vmem>>, %arg11: memref<8x2x32xf32, #tpu.memory_space<vmem>>, %arg12: memref<8x2x32xf32, #tpu.memory_space<vmem>>, %arg13: memref<8x2x32xf32, #tpu.memory_space<vmem>>) attributes {dimension_semantics = [#tpu.dimension_semantics<parallel>, #tpu.dimension_semantics<arbitrary>], iteration_bounds = array<i64: 1, 1>, scalar_prefetch = 0 : i64, scratch_operands = 4 : i64, tpu.core_type = #tpu.core_type<tc>, window_params = [{transform_indices = @transform_0, window_bounds = array<i64: 2, 8, 4>}, {pipeline_mode = #tpu.pipeline_mode<synchronous>, transform_indices = @transform_1, window_bounds = array<i64: 3, 4, 32>}, {pipeline_mode = #tpu.pipeline_mode<synchronous>, transform_indices = @transform_2, window_bounds = array<i64: 3, 32, 32>}, {pipeline_mode = #tpu.pipeline_mode<synchronous>, transform_indices = @transform_3, window_bounds = array<i64: 3, 1, 32>}, {pipeline_mode = #tpu.pipeline_mode<synchronous>, transform_indices = @transform_4, window_bounds = array<i64: 1, 32>}, {pipeline_mode = #tpu.pipeline_mode<synchronous>, transform_indices = @transform_5, window_bounds = array<i64: 1, 32>}, {pipeline_mode = #tpu.pipeline_mode<synchronous>, transform_indices = @transform_6, window_bounds = array<i64: 1, 1>}, {transform_indices = @transform_7, window_bounds = array<i64: 2, 1>}]} {
    %c0_i32 = arith.constant 0 : i32
    %0 = arith.cmpi eq, %arg1, %c0_i32 : i32
    %1 = arith.extui %0 : i1 to i32
    %c0_i32_0 = arith.constant 0 : i32
    %2 = arith.cmpi ne, %1, %c0_i32_0 : i32
    scf.if %2 {
      %cst_144 = arith.constant 0.000000e+00 : f32
      %317 = vector.broadcast %cst_144 : f32 to vector<2x32xf32>
      %c0_145 = arith.constant 0 : index
      %c0_146 = arith.constant 0 : index
      %318 = vector.load %arg10[%c0_145, %c0_146] : memref<2x32xf32, #tpu.memory_space<vmem>>, vector<2x32xf32>
      tpu.vector_store %arg10[%c0_145, %c0_146], %317 {strides = array<i32>} : memref<2x32xf32, #tpu.memory_space<vmem>>, vector<2x32xf32>,
    } else {
    }
    %c0 = arith.constant 0 : index
    %c0_1 = arith.constant 0 : index
    %c0_2 = arith.constant 0 : index
    %3 = vector.load %arg2[%c0, %c0_1, %c0_2] : memref<2x8x4xf32, #tpu.memory_space<vmem>>, vector<2x8x4xf32>
    %4 = tpu.transpose %3, [1, 0, 2] : vector<2x8x4xf32> -> vector<8x2x4xf32>
    %5 = vector.shape_cast %4 : vector<8x2x4xf32> to vector<16x4xf32>
    %c0_3 = arith.constant 0 : index
    %c0_4 = arith.constant 0 : index
    %c0_5 = arith.constant 0 : index
    %6 = vector.load %arg3[%c0_3, %c0_4, %c0_5] : memref<3x4x32xf32, #tpu.memory_space<vmem>>, vector<1x4x32xf32>
    %7 = vector.shape_cast %6 : vector<1x4x32xf32> to vector<4x32xf32>
    %cst = arith.constant dense<0.000000e+00> : vector<16x32xf32>
    %8 = tpu.matmul %5, %7, %cst {dimension_numbers = #tpu.dot_dimension_numbers<[1], [0], [0], [1], [0, 0, 1, 1], [], []>} : vector<16x4xf32>, vector<4x32xf32>, vector<16x32xf32> -> vector<16x32xf32>
    %c0_6 = arith.constant 0 : index
    %c0_7 = arith.constant 0 : index
    %c0_8 = arith.constant 0 : index
    %9 = vector.load %arg5[%c0_6, %c0_7, %c0_8] : memref<3x1x32xf32, #tpu.memory_space<vmem>>, vector<1x1x32xf32>
    %10 = vector.shape_cast %9 : vector<1x1x32xf32> to vector<1x32xf32>
    %11 = vector.broadcast %10 : vector<1x32xf32> to vector<16x32xf32>
    %12 = arith.addf %8, %11 : vector<16x32xf32>
    %13 = vector.shape_cast %12 : vector<16x32xf32> to vector<8x2x32xf32>
    %c0_9 = arith.constant 0 : index
    %c0_10 = arith.constant 0 : index
    %c0_11 = arith.constant 0 : index
    %14 = vector.load %arg11[%c0_9, %c0_10, %c0_11] : memref<8x2x32xf32, #tpu.memory_space<vmem>>, vector<8x2x32xf32>
    tpu.vector_store %arg11[%c0_9, %c0_10, %c0_11], %13 {strides = array<i32>} : memref<8x2x32xf32, #tpu.memory_space<vmem>>, vector<8x2x32xf32>,
    %c1 = arith.constant 1 : index
    %c0_12 = arith.constant 0 : index
    %c0_13 = arith.constant 0 : index
    %15 = vector.load %arg3[%c1, %c0_12, %c0_13] : memref<3x4x32xf32, #tpu.memory_space<vmem>>, vector<1x4x32xf32>
    %16 = vector.shape_cast %15 : vector<1x4x32xf32> to vector<4x32xf32>
    %cst_14 = arith.constant dense<0.000000e+00> : vector<16x32xf32>
    %17 = tpu.matmul %5, %16, %cst_14 {dimension_numbers = #tpu.dot_dimension_numbers<[1], [0], [0], [1], [0, 0, 1, 1], [], []>} : vector<16x4xf32>, vector<4x32xf32>, vector<16x32xf32> -> vector<16x32xf32>
    %c1_15 = arith.constant 1 : index
    %c0_16 = arith.constant 0 : index
    %c0_17 = arith.constant 0 : index
    %18 = vector.load %arg5[%c1_15, %c0_16, %c0_17] : memref<3x1x32xf32, #tpu.memory_space<vmem>>, vector<1x1x32xf32>
    %19 = vector.shape_cast %18 : vector<1x1x32xf32> to vector<1x32xf32>
    %20 = vector.broadcast %19 : vector<1x32xf32> to vector<16x32xf32>
    %21 = arith.addf %17, %20 : vector<16x32xf32>
    %22 = vector.shape_cast %21 : vector<16x32xf32> to vector<8x2x32xf32>
    %c0_18 = arith.constant 0 : index
    %c0_19 = arith.constant 0 : index
    %c0_20 = arith.constant 0 : index
    %23 = vector.load %arg12[%c0_18, %c0_19, %c0_20] : memref<8x2x32xf32, #tpu.memory_space<vmem>>, vector<8x2x32xf32>
    tpu.vector_store %arg12[%c0_18, %c0_19, %c0_20], %22 {strides = array<i32>} : memref<8x2x32xf32, #tpu.memory_space<vmem>>, vector<8x2x32xf32>,
    %c2 = arith.constant 2 : index
    %c0_21 = arith.constant 0 : index
    %c0_22 = arith.constant 0 : index
    %24 = vector.load %arg3[%c2, %c0_21, %c0_22] : memref<3x4x32xf32, #tpu.memory_space<vmem>>, vector<1x4x32xf32>
    %25 = vector.shape_cast %24 : vector<1x4x32xf32> to vector<4x32xf32>
    %cst_23 = arith.constant dense<0.000000e+00> : vector<16x32xf32>
    %26 = tpu.matmul %5, %25, %cst_23 {dimension_numbers = #tpu.dot_dimension_numbers<[1], [0], [0], [1], [0, 0, 1, 1], [], []>} : vector<16x4xf32>, vector<4x32xf32>, vector<16x32xf32> -> vector<16x32xf32>
    %c2_24 = arith.constant 2 : index
    %c0_25 = arith.constant 0 : index
    %c0_26 = arith.constant 0 : index
    %27 = vector.load %arg5[%c2_24, %c0_25, %c0_26] : memref<3x1x32xf32, #tpu.memory_space<vmem>>, vector<1x1x32xf32>
    %28 = vector.shape_cast %27 : vector<1x1x32xf32> to vector<1x32xf32>
    %29 = vector.broadcast %28 : vector<1x32xf32> to vector<16x32xf32>
    %30 = arith.addf %26, %29 : vector<16x32xf32>
    %31 = vector.shape_cast %30 : vector<16x32xf32> to vector<8x2x32xf32>
    %c0_27 = arith.constant 0 : index
    %c0_28 = arith.constant 0 : index
    %c0_29 = arith.constant 0 : index
    %32 = vector.load %arg13[%c0_27, %c0_28, %c0_29] : memref<8x2x32xf32, #tpu.memory_space<vmem>>, vector<8x2x32xf32>
    tpu.vector_store %arg13[%c0_27, %c0_28, %c0_29], %31 {strides = array<i32>} : memref<8x2x32xf32, #tpu.memory_space<vmem>>, vector<8x2x32xf32>,
    %c0_30 = arith.constant 0 : index
    %c0_31 = arith.constant 0 : index
    %33 = vector.load %arg6[%c0_30, %c0_31] : memref<1x32xf32, #tpu.memory_space<vmem>>, vector<1x32xf32>
    %c0_32 = arith.constant 0 : index
    %c0_33 = arith.constant 0 : index
    %c0_34 = arith.constant 0 : index
    %34 = vector.load %arg4[%c0_32, %c0_33, %c0_34] : memref<3x32x32xf32, #tpu.memory_space<vmem>>, vector<1x32x32xf32>
    %35 = vector.shape_cast %34 : vector<1x32x32xf32> to vector<32x32xf32>
    %c1_35 = arith.constant 1 : index
    %c0_36 = arith.constant 0 : index
    %c0_37 = arith.constant 0 : index
    %36 = vector.load %arg4[%c1_35, %c0_36, %c0_37] : memref<3x32x32xf32, #tpu.memory_space<vmem>>, vector<1x32x32xf32>
    %37 = vector.shape_cast %36 : vector<1x32x32xf32> to vector<32x32xf32>
    %c2_38 = arith.constant 2 : index
    %c0_39 = arith.constant 0 : index
    %c0_40 = arith.constant 0 : index
    %38 = vector.load %arg4[%c2_38, %c0_39, %c0_40] : memref<3x32x32xf32, #tpu.memory_space<vmem>>, vector<1x32x32xf32>
    %39 = vector.shape_cast %38 : vector<1x32x32xf32> to vector<32x32xf32>
    %c0_41 = arith.constant 0 : index
    %c0_42 = arith.constant 0 : index
    %40 = vector.load %arg10[%c0_41, %c0_42] : memref<2x32xf32, #tpu.memory_space<vmem>>, vector<2x32xf32>
    %c0_i32_43 = arith.constant 0 : i32
    %cst_44 = arith.constant dense<0.000000e+00> : vector<2x32xf32>
    %41 = tpu.matmul %40, %35, %cst_44 {dimension_numbers = #tpu.dot_dimension_numbers<[1], [0], [0], [1], [0, 0, 1, 1], [], []>} : vector<2x32xf32>, vector<32x32xf32>, vector<2x32xf32> -> vector<2x32xf32>
    %cst_45 = arith.constant dense<0.000000e+00> : vector<2x32xf32>
    %42 = tpu.matmul %40, %37, %cst_45 {dimension_numbers = #tpu.dot_dimension_numbers<[1], [0], [0], [1], [0, 0, 1, 1], [], []>} : vector<2x32xf32>, vector<32x32xf32>, vector<2x32xf32> -> vector<2x32xf32>
    %cst_46 = arith.constant dense<0.000000e+00> : vector<2x32xf32>
    %43 = tpu.matmul %40, %39, %cst_46 {dimension_numbers = #tpu.dot_dimension_numbers<[1], [0], [0], [1], [0, 0, 1, 1], [], []>} : vector<2x32xf32>, vector<32x32xf32>, vector<2x32xf32> -> vector<2x32xf32>
    %44 = arith.index_cast %c0_i32_43 : i32 to index
    %c0_47 = arith.constant 0 : index
    %c0_48 = arith.constant 0 : index
    %45 = vector.load %arg11[%44, %c0_47, %c0_48] : memref<8x2x32xf32, #tpu.memory_space<vmem>>, vector<1x2x32xf32>
    %46 = vector.shape_cast %45 : vector<1x2x32xf32> to vector<2x32xf32>
    %47 = arith.addf %46, %41 : vector<2x32xf32>
    %48 = arith.negf %47 : vector<2x32xf32>
    %49 = math.exp %48 : vector<2x32xf32>
    %cst_49 = arith.constant 1.000000e+00 : f32
    %50 = vector.broadcast %cst_49 : f32 to vector<2x32xf32>
    %51 = arith.addf %50, %49 : vector<2x32xf32>
    %52 = arith.divf %50, %51 : vector<2x32xf32>
    %53 = arith.index_cast %c0_i32_43 : i32 to index
    %c0_50 = arith.constant 0 : index
    %c0_51 = arith.constant 0 : index
    %54 = vector.load %arg12[%53, %c0_50, %c0_51] : memref<8x2x32xf32, #tpu.memory_space<vmem>>, vector<1x2x32xf32>
    %55 = vector.shape_cast %54 : vector<1x2x32xf32> to vector<2x32xf32>
    %56 = arith.addf %55, %42 : vector<2x32xf32>
    %57 = arith.negf %56 : vector<2x32xf32>
    %58 = math.exp %57 : vector<2x32xf32>
    %cst_52 = arith.constant 1.000000e+00 : f32
    %59 = vector.broadcast %cst_52 : f32 to vector<2x32xf32>
    %60 = arith.addf %59, %58 : vector<2x32xf32>
    %61 = arith.divf %59, %60 : vector<2x32xf32>
    %62 = arith.index_cast %c0_i32_43 : i32 to index
    %c0_53 = arith.constant 0 : index
    %c0_54 = arith.constant 0 : index
    %63 = vector.load %arg13[%62, %c0_53, %c0_54] : memref<8x2x32xf32, #tpu.memory_space<vmem>>, vector<1x2x32xf32>
    %64 = vector.shape_cast %63 : vector<1x2x32xf32> to vector<2x32xf32>
    %65 = vector.broadcast %33 : vector<1x32xf32> to vector<2x32xf32>
    %66 = arith.addf %43, %65 : vector<2x32xf32>
    %67 = arith.mulf %52, %66 : vector<2x32xf32>
    %68 = arith.addf %64, %67 : vector<2x32xf32>
    %69 = math.tanh %68 : vector<2x32xf32>
    %cst_55 = arith.constant 1.000000e+00 : f32
    %70 = vector.broadcast %cst_55 : f32 to vector<2x32xf32>
    %71 = arith.subf %70, %61 : vector<2x32xf32>
    %72 = arith.mulf %71, %69 : vector<2x32xf32>
    %73 = arith.mulf %61, %40 : vector<2x32xf32>
    %74 = arith.addf %72, %73 : vector<2x32xf32>
    %c1_i32 = arith.constant 1 : i32
    %cst_56 = arith.constant dense<0.000000e+00> : vector<2x32xf32>
    %75 = tpu.matmul %74, %35, %cst_56 {dimension_numbers = #tpu.dot_dimension_numbers<[1], [0], [0], [1], [0, 0, 1, 1], [], []>} : vector<2x32xf32>, vector<32x32xf32>, vector<2x32xf32> -> vector<2x32xf32>
    %cst_57 = arith.constant dense<0.000000e+00> : vector<2x32xf32>
    %76 = tpu.matmul %74, %37, %cst_57 {dimension_numbers = #tpu.dot_dimension_numbers<[1], [0], [0], [1], [0, 0, 1, 1], [], []>} : vector<2x32xf32>, vector<32x32xf32>, vector<2x32xf32> -> vector<2x32xf32>
    %cst_58 = arith.constant dense<0.000000e+00> : vector<2x32xf32>
    %77 = tpu.matmul %74, %39, %cst_58 {dimension_numbers = #tpu.dot_dimension_numbers<[1], [0], [0], [1], [0, 0, 1, 1], [], []>} : vector<2x32xf32>, vector<32x32xf32>, vector<2x32xf32> -> vector<2x32xf32>
    %78 = arith.index_cast %c1_i32 : i32 to index
    %c0_59 = arith.constant 0 : index
    %c0_60 = arith.constant 0 : index
    %79 = vector.load %arg11[%78, %c0_59, %c0_60] : memref<8x2x32xf32, #tpu.memory_space<vmem>>, vector<1x2x32xf32>
    %80 = vector.shape_cast %79 : vector<1x2x32xf32> to vector<2x32xf32>
    %81 = arith.addf %80, %75 : vector<2x32xf32>
    %82 = arith.negf %81 : vector<2x32xf32>
    %83 = math.exp %82 : vector<2x32xf32>
    %cst_61 = arith.constant 1.000000e+00 : f32
    %84 = vector.broadcast %cst_61 : f32 to vector<2x32xf32>
    %85 = arith.addf %84, %83 : vector<2x32xf32>
    %86 = arith.divf %84, %85 : vector<2x32xf32>
    %87 = arith.index_cast %c1_i32 : i32 to index
    %c0_62 = arith.constant 0 : index
    %c0_63 = arith.constant 0 : index
    %88 = vector.load %arg12[%87, %c0_62, %c0_63] : memref<8x2x32xf32, #tpu.memory_space<vmem>>, vector<1x2x32xf32>
    %89 = vector.shape_cast %88 : vector<1x2x32xf32> to vector<2x32xf32>
    %90 = arith.addf %89, %76 : vector<2x32xf32>
    %91 = arith.negf %90 : vector<2x32xf32>
    %92 = math.exp %91 : vector<2x32xf32>
    %cst_64 = arith.constant 1.000000e+00 : f32
    %93 = vector.broadcast %cst_64 : f32 to vector<2x32xf32>
    %94 = arith.addf %93, %92 : vector<2x32xf32>
    %95 = arith.divf %93, %94 : vector<2x32xf32>
    %96 = arith.index_cast %c1_i32 : i32 to index
    %c0_65 = arith.constant 0 : index
    %c0_66 = arith.constant 0 : index
    %97 = vector.load %arg13[%96, %c0_65, %c0_66] : memref<8x2x32xf32, #tpu.memory_space<vmem>>, vector<1x2x32xf32>
    %98 = vector.shape_cast %97 : vector<1x2x32xf32> to vector<2x32xf32>
    %99 = vector.broadcast %33 : vector<1x32xf32> to vector<2x32xf32>
    %100 = arith.addf %77, %99 : vector<2x32xf32>
    %101 = arith.mulf %86, %100 : vector<2x32xf32>
    %102 = arith.addf %98, %101 : vector<2x32xf32>
    %103 = math.tanh %102 : vector<2x32xf32>
    %cst_67 = arith.constant 1.000000e+00 : f32
    %104 = vector.broadcast %cst_67 : f32 to vector<2x32xf32>
    %105 = arith.subf %104, %95 : vector<2x32xf32>
    %106 = arith.mulf %105, %103 : vector<2x32xf32>
    %107 = arith.mulf %95, %74 : vector<2x32xf32>
    %108 = arith.addf %106, %107 : vector<2x32xf32>
    %c2_i32 = arith.constant 2 : i32
    %cst_68 = arith.constant dense<0.000000e+00> : vector<2x32xf32>
    %109 = tpu.matmul %108, %35, %cst_68 {dimension_numbers = #tpu.dot_dimension_numbers<[1], [0], [0], [1], [0, 0, 1, 1], [], []>} : vector<2x32xf32>, vector<32x32xf32>, vector<2x32xf32> -> vector<2x32xf32>
    %cst_69 = arith.constant dense<0.000000e+00> : vector<2x32xf32>
    %110 = tpu.matmul %108, %37, %cst_69 {dimension_numbers = #tpu.dot_dimension_numbers<[1], [0], [0], [1], [0, 0, 1, 1], [], []>} : vector<2x32xf32>, vector<32x32xf32>, vector<2x32xf32> -> vector<2x32xf32>
    %cst_70 = arith.constant dense<0.000000e+00> : vector<2x32xf32>
    %111 = tpu.matmul %108, %39, %cst_70 {dimension_numbers = #tpu.dot_dimension_numbers<[1], [0], [0], [1], [0, 0, 1, 1], [], []>} : vector<2x32xf32>, vector<32x32xf32>, vector<2x32xf32> -> vector<2x32xf32>
    %112 = arith.index_cast %c2_i32 : i32 to index
    %c0_71 = arith.constant 0 : index
    %c0_72 = arith.constant 0 : index
    %113 = vector.load %arg11[%112, %c0_71, %c0_72] : memref<8x2x32xf32, #tpu.memory_space<vmem>>, vector<1x2x32xf32>
    %114 = vector.shape_cast %113 : vector<1x2x32xf32> to vector<2x32xf32>
    %115 = arith.addf %114, %109 : vector<2x32xf32>
    %116 = arith.negf %115 : vector<2x32xf32>
    %117 = math.exp %116 : vector<2x32xf32>
    %cst_73 = arith.constant 1.000000e+00 : f32
    %118 = vector.broadcast %cst_73 : f32 to vector<2x32xf32>
    %119 = arith.addf %118, %117 : vector<2x32xf32>
    %120 = arith.divf %118, %119 : vector<2x32xf32>
    %121 = arith.index_cast %c2_i32 : i32 to index
    %c0_74 = arith.constant 0 : index
    %c0_75 = arith.constant 0 : index
    %122 = vector.load %arg12[%121, %c0_74, %c0_75] : memref<8x2x32xf32, #tpu.memory_space<vmem>>, vector<1x2x32xf32>
    %123 = vector.shape_cast %122 : vector<1x2x32xf32> to vector<2x32xf32>
    %124 = arith.addf %123, %110 : vector<2x32xf32>
    %125 = arith.negf %124 : vector<2x32xf32>
    %126 = math.exp %125 : vector<2x32xf32>
    %cst_76 = arith.constant 1.000000e+00 : f32
    %127 = vector.broadcast %cst_76 : f32 to vector<2x32xf32>
    %128 = arith.addf %127, %126 : vector<2x32xf32>
    %129 = arith.divf %127, %128 : vector<2x32xf32>
    %130 = arith.index_cast %c2_i32 : i32 to index
    %c0_77 = arith.constant 0 : index
    %c0_78 = arith.constant 0 : index
    %131 = vector.load %arg13[%130, %c0_77, %c0_78] : memref<8x2x32xf32, #tpu.memory_space<vmem>>, vector<1x2x32xf32>
    %132 = vector.shape_cast %131 : vector<1x2x32xf32> to vector<2x32xf32>
    %133 = vector.broadcast %33 : vector<1x32xf32> to vector<2x32xf32>
    %134 = arith.addf %111, %133 : vector<2x32xf32>
    %135 = arith.mulf %120, %134 : vector<2x32xf32>
    %136 = arith.addf %132, %135 : vector<2x32xf32>
    %137 = math.tanh %136 : vector<2x32xf32>
    %cst_79 = arith.constant 1.000000e+00 : f32
    %138 = vector.broadcast %cst_79 : f32 to vector<2x32xf32>
    %139 = arith.subf %138, %129 : vector<2x32xf32>
    %140 = arith.mulf %139, %137 : vector<2x32xf32>
    %141 = arith.mulf %129, %108 : vector<2x32xf32>
    %142 = arith.addf %140, %141 : vector<2x32xf32>
    %c3_i32 = arith.constant 3 : i32
    %cst_80 = arith.constant dense<0.000000e+00> : vector<2x32xf32>
    %143 = tpu.matmul %142, %35, %cst_80 {dimension_numbers = #tpu.dot_dimension_numbers<[1], [0], [0], [1], [0, 0, 1, 1], [], []>} : vector<2x32xf32>, vector<32x32xf32>, vector<2x32xf32> -> vector<2x32xf32>
    %cst_81 = arith.constant dense<0.000000e+00> : vector<2x32xf32>
    %144 = tpu.matmul %142, %37, %cst_81 {dimension_numbers = #tpu.dot_dimension_numbers<[1], [0], [0], [1], [0, 0, 1, 1], [], []>} : vector<2x32xf32>, vector<32x32xf32>, vector<2x32xf32> -> vector<2x32xf32>
    %cst_82 = arith.constant dense<0.000000e+00> : vector<2x32xf32>
    %145 = tpu.matmul %142, %39, %cst_82 {dimension_numbers = #tpu.dot_dimension_numbers<[1], [0], [0], [1], [0, 0, 1, 1], [], []>} : vector<2x32xf32>, vector<32x32xf32>, vector<2x32xf32> -> vector<2x32xf32>
    %146 = arith.index_cast %c3_i32 : i32 to index
    %c0_83 = arith.constant 0 : index
    %c0_84 = arith.constant 0 : index
    %147 = vector.load %arg11[%146, %c0_83, %c0_84] : memref<8x2x32xf32, #tpu.memory_space<vmem>>, vector<1x2x32xf32>
    %148 = vector.shape_cast %147 : vector<1x2x32xf32> to vector<2x32xf32>
    %149 = arith.addf %148, %143 : vector<2x32xf32>
    %150 = arith.negf %149 : vector<2x32xf32>
    %151 = math.exp %150 : vector<2x32xf32>
    %cst_85 = arith.constant 1.000000e+00 : f32
    %152 = vector.broadcast %cst_85 : f32 to vector<2x32xf32>
    %153 = arith.addf %152, %151 : vector<2x32xf32>
    %154 = arith.divf %152, %153 : vector<2x32xf32>
    %155 = arith.index_cast %c3_i32 : i32 to index
    %c0_86 = arith.constant 0 : index
    %c0_87 = arith.constant 0 : index
    %156 = vector.load %arg12[%155, %c0_86, %c0_87] : memref<8x2x32xf32, #tpu.memory_space<vmem>>, vector<1x2x32xf32>
    %157 = vector.shape_cast %156 : vector<1x2x32xf32> to vector<2x32xf32>
    %158 = arith.addf %157, %144 : vector<2x32xf32>
    %159 = arith.negf %158 : vector<2x32xf32>
    %160 = math.exp %159 : vector<2x32xf32>
    %cst_88 = arith.constant 1.000000e+00 : f32
    %161 = vector.broadcast %cst_88 : f32 to vector<2x32xf32>
    %162 = arith.addf %161, %160 : vector<2x32xf32>
    %163 = arith.divf %161, %162 : vector<2x32xf32>
    %164 = arith.index_cast %c3_i32 : i32 to index
    %c0_89 = arith.constant 0 : index
    %c0_90 = arith.constant 0 : index
    %165 = vector.load %arg13[%164, %c0_89, %c0_90] : memref<8x2x32xf32, #tpu.memory_space<vmem>>, vector<1x2x32xf32>
    %166 = vector.shape_cast %165 : vector<1x2x32xf32> to vector<2x32xf32>
    %167 = vector.broadcast %33 : vector<1x32xf32> to vector<2x32xf32>
    %168 = arith.addf %145, %167 : vector<2x32xf32>
    %169 = arith.mulf %154, %168 : vector<2x32xf32>
    %170 = arith.addf %166, %169 : vector<2x32xf32>
    %171 = math.tanh %170 : vector<2x32xf32>
    %cst_91 = arith.constant 1.000000e+00 : f32
    %172 = vector.broadcast %cst_91 : f32 to vector<2x32xf32>
    %173 = arith.subf %172, %163 : vector<2x32xf32>
    %174 = arith.mulf %173, %171 : vector<2x32xf32>
    %175 = arith.mulf %163, %142 : vector<2x32xf32>
    %176 = arith.addf %174, %175 : vector<2x32xf32>
    %c4_i32 = arith.constant 4 : i32
    %cst_92 = arith.constant dense<0.000000e+00> : vector<2x32xf32>
    %177 = tpu.matmul %176, %35, %cst_92 {dimension_numbers = #tpu.dot_dimension_numbers<[1], [0], [0], [1], [0, 0, 1, 1], [], []>} : vector<2x32xf32>, vector<32x32xf32>, vector<2x32xf32> -> vector<2x32xf32>
    %cst_93 = arith.constant dense<0.000000e+00> : vector<2x32xf32>
    %178 = tpu.matmul %176, %37, %cst_93 {dimension_numbers = #tpu.dot_dimension_numbers<[1], [0], [0], [1], [0, 0, 1, 1], [], []>} : vector<2x32xf32>, vector<32x32xf32>, vector<2x32xf32> -> vector<2x32xf32>
    %cst_94 = arith.constant dense<0.000000e+00> : vector<2x32xf32>
    %179 = tpu.matmul %176, %39, %cst_94 {dimension_numbers = #tpu.dot_dimension_numbers<[1], [0], [0], [1], [0, 0, 1, 1], [], []>} : vector<2x32xf32>, vector<32x32xf32>, vector<2x32xf32> -> vector<2x32xf32>
    %180 = arith.index_cast %c4_i32 : i32 to index
    %c0_95 = arith.constant 0 : index
    %c0_96 = arith.constant 0 : index
    %181 = vector.load %arg11[%180, %c0_95, %c0_96] : memref<8x2x32xf32, #tpu.memory_space<vmem>>, vector<1x2x32xf32>
    %182 = vector.shape_cast %181 : vector<1x2x32xf32> to vector<2x32xf32>
    %183 = arith.addf %182, %177 : vector<2x32xf32>
    %184 = arith.negf %183 : vector<2x32xf32>
    %185 = math.exp %184 : vector<2x32xf32>
    %cst_97 = arith.constant 1.000000e+00 : f32
    %186 = vector.broadcast %cst_97 : f32 to vector<2x32xf32>
    %187 = arith.addf %186, %185 : vector<2x32xf32>
    %188 = arith.divf %186, %187 : vector<2x32xf32>
    %189 = arith.index_cast %c4_i32 : i32 to index
    %c0_98 = arith.constant 0 : index
    %c0_99 = arith.constant 0 : index
    %190 = vector.load %arg12[%189, %c0_98, %c0_99] : memref<8x2x32xf32, #tpu.memory_space<vmem>>, vector<1x2x32xf32>
    %191 = vector.shape_cast %190 : vector<1x2x32xf32> to vector<2x32xf32>
    %192 = arith.addf %191, %178 : vector<2x32xf32>
    %193 = arith.negf %192 : vector<2x32xf32>
    %194 = math.exp %193 : vector<2x32xf32>
    %cst_100 = arith.constant 1.000000e+00 : f32
    %195 = vector.broadcast %cst_100 : f32 to vector<2x32xf32>
    %196 = arith.addf %195, %194 : vector<2x32xf32>
    %197 = arith.divf %195, %196 : vector<2x32xf32>
    %198 = arith.index_cast %c4_i32 : i32 to index
    %c0_101 = arith.constant 0 : index
    %c0_102 = arith.constant 0 : index
    %199 = vector.load %arg13[%198, %c0_101, %c0_102] : memref<8x2x32xf32, #tpu.memory_space<vmem>>, vector<1x2x32xf32>
    %200 = vector.shape_cast %199 : vector<1x2x32xf32> to vector<2x32xf32>
    %201 = vector.broadcast %33 : vector<1x32xf32> to vector<2x32xf32>
    %202 = arith.addf %179, %201 : vector<2x32xf32>
    %203 = arith.mulf %188, %202 : vector<2x32xf32>
    %204 = arith.addf %200, %203 : vector<2x32xf32>
    %205 = math.tanh %204 : vector<2x32xf32>
    %cst_103 = arith.constant 1.000000e+00 : f32
    %206 = vector.broadcast %cst_103 : f32 to vector<2x32xf32>
    %207 = arith.subf %206, %197 : vector<2x32xf32>
    %208 = arith.mulf %207, %205 : vector<2x32xf32>
    %209 = arith.mulf %197, %176 : vector<2x32xf32>
    %210 = arith.addf %208, %209 : vector<2x32xf32>
    %c5_i32 = arith.constant 5 : i32
    %cst_104 = arith.constant dense<0.000000e+00> : vector<2x32xf32>
    %211 = tpu.matmul %210, %35, %cst_104 {dimension_numbers = #tpu.dot_dimension_numbers<[1], [0], [0], [1], [0, 0, 1, 1], [], []>} : vector<2x32xf32>, vector<32x32xf32>, vector<2x32xf32> -> vector<2x32xf32>
    %cst_105 = arith.constant dense<0.000000e+00> : vector<2x32xf32>
    %212 = tpu.matmul %210, %37, %cst_105 {dimension_numbers = #tpu.dot_dimension_numbers<[1], [0], [0], [1], [0, 0, 1, 1], [], []>} : vector<2x32xf32>, vector<32x32xf32>, vector<2x32xf32> -> vector<2x32xf32>
    %cst_106 = arith.constant dense<0.000000e+00> : vector<2x32xf32>
    %213 = tpu.matmul %210, %39, %cst_106 {dimension_numbers = #tpu.dot_dimension_numbers<[1], [0], [0], [1], [0, 0, 1, 1], [], []>} : vector<2x32xf32>, vector<32x32xf32>, vector<2x32xf32> -> vector<2x32xf32>
    %214 = arith.index_cast %c5_i32 : i32 to index
    %c0_107 = arith.constant 0 : index
    %c0_108 = arith.constant 0 : index
    %215 = vector.load %arg11[%214, %c0_107, %c0_108] : memref<8x2x32xf32, #tpu.memory_space<vmem>>, vector<1x2x32xf32>
    %216 = vector.shape_cast %215 : vector<1x2x32xf32> to vector<2x32xf32>
    %217 = arith.addf %216, %211 : vector<2x32xf32>
    %218 = arith.negf %217 : vector<2x32xf32>
    %219 = math.exp %218 : vector<2x32xf32>
    %cst_109 = arith.constant 1.000000e+00 : f32
    %220 = vector.broadcast %cst_109 : f32 to vector<2x32xf32>
    %221 = arith.addf %220, %219 : vector<2x32xf32>
    %222 = arith.divf %220, %221 : vector<2x32xf32>
    %223 = arith.index_cast %c5_i32 : i32 to index
    %c0_110 = arith.constant 0 : index
    %c0_111 = arith.constant 0 : index
    %224 = vector.load %arg12[%223, %c0_110, %c0_111] : memref<8x2x32xf32, #tpu.memory_space<vmem>>, vector<1x2x32xf32>
    %225 = vector.shape_cast %224 : vector<1x2x32xf32> to vector<2x32xf32>
    %226 = arith.addf %225, %212 : vector<2x32xf32>
    %227 = arith.negf %226 : vector<2x32xf32>
    %228 = math.exp %227 : vector<2x32xf32>
    %cst_112 = arith.constant 1.000000e+00 : f32
    %229 = vector.broadcast %cst_112 : f32 to vector<2x32xf32>
    %230 = arith.addf %229, %228 : vector<2x32xf32>
    %231 = arith.divf %229, %230 : vector<2x32xf32>
    %232 = arith.index_cast %c5_i32 : i32 to index
    %c0_113 = arith.constant 0 : index
    %c0_114 = arith.constant 0 : index
    %233 = vector.load %arg13[%232, %c0_113, %c0_114] : memref<8x2x32xf32, #tpu.memory_space<vmem>>, vector<1x2x32xf32>
    %234 = vector.shape_cast %233 : vector<1x2x32xf32> to vector<2x32xf32>
    %235 = vector.broadcast %33 : vector<1x32xf32> to vector<2x32xf32>
    %236 = arith.addf %213, %235 : vector<2x32xf32>
    %237 = arith.mulf %222, %236 : vector<2x32xf32>
    %238 = arith.addf %234, %237 : vector<2x32xf32>
    %239 = math.tanh %238 : vector<2x32xf32>
    %cst_115 = arith.constant 1.000000e+00 : f32
    %240 = vector.broadcast %cst_115 : f32 to vector<2x32xf32>
    %241 = arith.subf %240, %231 : vector<2x32xf32>
    %242 = arith.mulf %241, %239 : vector<2x32xf32>
    %243 = arith.mulf %231, %210 : vector<2x32xf32>
    %244 = arith.addf %242, %243 : vector<2x32xf32>
    %c6_i32 = arith.constant 6 : i32
    %cst_116 = arith.constant dense<0.000000e+00> : vector<2x32xf32>
    %245 = tpu.matmul %244, %35, %cst_116 {dimension_numbers = #tpu.dot_dimension_numbers<[1], [0], [0], [1], [0, 0, 1, 1], [], []>} : vector<2x32xf32>, vector<32x32xf32>, vector<2x32xf32> -> vector<2x32xf32>
    %cst_117 = arith.constant dense<0.000000e+00> : vector<2x32xf32>
    %246 = tpu.matmul %244, %37, %cst_117 {dimension_numbers = #tpu.dot_dimension_numbers<[1], [0], [0], [1], [0, 0, 1, 1], [], []>} : vector<2x32xf32>, vector<32x32xf32>, vector<2x32xf32> -> vector<2x32xf32>
    %cst_118 = arith.constant dense<0.000000e+00> : vector<2x32xf32>
    %247 = tpu.matmul %244, %39, %cst_118 {dimension_numbers = #tpu.dot_dimension_numbers<[1], [0], [0], [1], [0, 0, 1, 1], [], []>} : vector<2x32xf32>, vector<32x32xf32>, vector<2x32xf32> -> vector<2x32xf32>
    %248 = arith.index_cast %c6_i32 : i32 to index
    %c0_119 = arith.constant 0 : index
    %c0_120 = arith.constant 0 : index
    %249 = vector.load %arg11[%248, %c0_119, %c0_120] : memref<8x2x32xf32, #tpu.memory_space<vmem>>, vector<1x2x32xf32>
    %250 = vector.shape_cast %249 : vector<1x2x32xf32> to vector<2x32xf32>
    %251 = arith.addf %250, %245 : vector<2x32xf32>
    %252 = arith.negf %251 : vector<2x32xf32>
    %253 = math.exp %252 : vector<2x32xf32>
    %cst_121 = arith.constant 1.000000e+00 : f32
    %254 = vector.broadcast %cst_121 : f32 to vector<2x32xf32>
    %255 = arith.addf %254, %253 : vector<2x32xf32>
    %256 = arith.divf %254, %255 : vector<2x32xf32>
    %257 = arith.index_cast %c6_i32 : i32 to index
    %c0_122 = arith.constant 0 : index
    %c0_123 = arith.constant 0 : index
    %258 = vector.load %arg12[%257, %c0_122, %c0_123] : memref<8x2x32xf32, #tpu.memory_space<vmem>>, vector<1x2x32xf32>
    %259 = vector.shape_cast %258 : vector<1x2x32xf32> to vector<2x32xf32>
    %260 = arith.addf %259, %246 : vector<2x32xf32>
    %261 = arith.negf %260 : vector<2x32xf32>
    %262 = math.exp %261 : vector<2x32xf32>
    %cst_124 = arith.constant 1.000000e+00 : f32
    %263 = vector.broadcast %cst_124 : f32 to vector<2x32xf32>
    %264 = arith.addf %263, %262 : vector<2x32xf32>
    %265 = arith.divf %263, %264 : vector<2x32xf32>
    %266 = arith.index_cast %c6_i32 : i32 to index
    %c0_125 = arith.constant 0 : index
    %c0_126 = arith.constant 0 : index
    %267 = vector.load %arg13[%266, %c0_125, %c0_126] : memref<8x2x32xf32, #tpu.memory_space<vmem>>, vector<1x2x32xf32>
    %268 = vector.shape_cast %267 : vector<1x2x32xf32> to vector<2x32xf32>
    %269 = vector.broadcast %33 : vector<1x32xf32> to vector<2x32xf32>
    %270 = arith.addf %247, %269 : vector<2x32xf32>
    %271 = arith.mulf %256, %270 : vector<2x32xf32>
    %272 = arith.addf %268, %271 : vector<2x32xf32>
    %273 = math.tanh %272 : vector<2x32xf32>
    %cst_127 = arith.constant 1.000000e+00 : f32
    %274 = vector.broadcast %cst_127 : f32 to vector<2x32xf32>
    %275 = arith.subf %274, %265 : vector<2x32xf32>
    %276 = arith.mulf %275, %273 : vector<2x32xf32>
    %277 = arith.mulf %265, %244 : vector<2x32xf32>
    %278 = arith.addf %276, %277 : vector<2x32xf32>
    %c7_i32 = arith.constant 7 : i32
    %cst_128 = arith.constant dense<0.000000e+00> : vector<2x32xf32>
    %279 = tpu.matmul %278, %35, %cst_128 {dimension_numbers = #tpu.dot_dimension_numbers<[1], [0], [0], [1], [0, 0, 1, 1], [], []>} : vector<2x32xf32>, vector<32x32xf32>, vector<2x32xf32> -> vector<2x32xf32>
    %cst_129 = arith.constant dense<0.000000e+00> : vector<2x32xf32>
    %280 = tpu.matmul %278, %37, %cst_129 {dimension_numbers = #tpu.dot_dimension_numbers<[1], [0], [0], [1], [0, 0, 1, 1], [], []>} : vector<2x32xf32>, vector<32x32xf32>, vector<2x32xf32> -> vector<2x32xf32>
    %cst_130 = arith.constant dense<0.000000e+00> : vector<2x32xf32>
    %281 = tpu.matmul %278, %39, %cst_130 {dimension_numbers = #tpu.dot_dimension_numbers<[1], [0], [0], [1], [0, 0, 1, 1], [], []>} : vector<2x32xf32>, vector<32x32xf32>, vector<2x32xf32> -> vector<2x32xf32>
    %282 = arith.index_cast %c7_i32 : i32 to index
    %c0_131 = arith.constant 0 : index
    %c0_132 = arith.constant 0 : index
    %283 = vector.load %arg11[%282, %c0_131, %c0_132] : memref<8x2x32xf32, #tpu.memory_space<vmem>>, vector<1x2x32xf32>
    %284 = vector.shape_cast %283 : vector<1x2x32xf32> to vector<2x32xf32>
    %285 = arith.addf %284, %279 : vector<2x32xf32>
    %286 = arith.negf %285 : vector<2x32xf32>
    %287 = math.exp %286 : vector<2x32xf32>
    %cst_133 = arith.constant 1.000000e+00 : f32
    %288 = vector.broadcast %cst_133 : f32 to vector<2x32xf32>
    %289 = arith.addf %288, %287 : vector<2x32xf32>
    %290 = arith.divf %288, %289 : vector<2x32xf32>
    %291 = arith.index_cast %c7_i32 : i32 to index
    %c0_134 = arith.constant 0 : index
    %c0_135 = arith.constant 0 : index
    %292 = vector.load %arg12[%291, %c0_134, %c0_135] : memref<8x2x32xf32, #tpu.memory_space<vmem>>, vector<1x2x32xf32>
    %293 = vector.shape_cast %292 : vector<1x2x32xf32> to vector<2x32xf32>
    %294 = arith.addf %293, %280 : vector<2x32xf32>
    %295 = arith.negf %294 : vector<2x32xf32>
    %296 = math.exp %295 : vector<2x32xf32>
    %cst_136 = arith.constant 1.000000e+00 : f32
    %297 = vector.broadcast %cst_136 : f32 to vector<2x32xf32>
    %298 = arith.addf %297, %296 : vector<2x32xf32>
    %299 = arith.divf %297, %298 : vector<2x32xf32>
    %300 = arith.index_cast %c7_i32 : i32 to index
    %c0_137 = arith.constant 0 : index
    %c0_138 = arith.constant 0 : index
    %301 = vector.load %arg13[%300, %c0_137, %c0_138] : memref<8x2x32xf32, #tpu.memory_space<vmem>>, vector<1x2x32xf32>
    %302 = vector.shape_cast %301 : vector<1x2x32xf32> to vector<2x32xf32>
    %303 = vector.broadcast %33 : vector<1x32xf32> to vector<2x32xf32>
    %304 = arith.addf %281, %303 : vector<2x32xf32>
    %305 = arith.mulf %290, %304 : vector<2x32xf32>
    %306 = arith.addf %302, %305 : vector<2x32xf32>
    %307 = math.tanh %306 : vector<2x32xf32>
    %cst_139 = arith.constant 1.000000e+00 : f32
    %308 = vector.broadcast %cst_139 : f32 to vector<2x32xf32>
    %309 = arith.subf %308, %299 : vector<2x32xf32>
    %310 = arith.mulf %309, %307 : vector<2x32xf32>
    %311 = arith.mulf %299, %278 : vector<2x32xf32>
    %312 = arith.addf %310, %311 : vector<2x32xf32>
    %c8_i32 = arith.constant 8 : i32
    %c0_140 = arith.constant 0 : index
    %c0_141 = arith.constant 0 : index
    %313 = vector.load %arg10[%c0_140, %c0_141] : memref<2x32xf32, #tpu.memory_space<vmem>>, vector<2x32xf32>
    tpu.vector_store %arg10[%c0_140, %c0_141], %312 {strides = array<i32>} : memref<2x32xf32, #tpu.memory_space<vmem>>, vector<2x32xf32>,
    %c0_i32_142 = arith.constant 0 : i32
    %314 = arith.cmpi eq, %arg1, %c0_i32_142 : i32
    %315 = arith.extui %314 : i1 to i32
    %c0_i32_143 = arith.constant 0 : i32
    %316 = arith.cmpi ne, %315, %c0_i32_143 : i32
    scf.if %316 {
      %c0_144 = arith.constant 0 : index
      %c0_145 = arith.constant 0 : index
      %317 = vector.load %arg7[%c0_144, %c0_145] : memref<1x32xf32, #tpu.memory_space<vmem>>, vector<1x32xf32>
      %318 = vector.broadcast %317 : vector<1x32xf32> to vector<2x32xf32>
      %319 = arith.mulf %312, %318 : vector<2x32xf32>
      %cst_146 = arith.constant dense<0.000000e+00> : vector<2xf32>
      %320 = vector.multi_reduction <add>, %319, %cst_146 [1] : vector<2x32xf32> to vector<2xf32>
      %321 = vector.shape_cast %320 : vector<2xf32> to vector<2x1xf32>
      %c0_147 = arith.constant 0 : index
      %c0_148 = arith.constant 0 : index
      %322 = vector.load %arg8[%c0_147, %c0_148] : memref<1x1xf32, #tpu.memory_space<vmem>>, vector<1x1xf32>
      %323 = vector.broadcast %322 : vector<1x1xf32> to vector<2x1xf32>
      %324 = arith.addf %321, %323 : vector<2x1xf32>
      %325 = arith.negf %324 : vector<2x1xf32>
      %326 = math.exp %325 : vector<2x1xf32>
      %cst_149 = arith.constant 1.000000e+00 : f32
      %327 = vector.broadcast %cst_149 : f32 to vector<2x1xf32>
      %328 = arith.addf %327, %326 : vector<2x1xf32>
      %329 = arith.divf %327, %328 : vector<2x1xf32>
      %c0_150 = arith.constant 0 : index
      %c0_151 = arith.constant 0 : index
      %330 = vector.load %arg9[%c0_150, %c0_151] : memref<2x1xf32, #tpu.memory_space<vmem>>, vector<2x1xf32>
      tpu.vector_store %arg9[%c0_150, %c0_151], %329 {strides = array<i32>} : memref<2x1xf32, #tpu.memory_space<vmem>>, vector<2x1xf32>,
    } else {
    }
    return
  }
  func.func @transform_0(%arg0: i32, %arg1: i32) -> (i32, i32, i32) {
    %c0_i32 = arith.constant 0 : i32
    %c0_i32_0 = arith.constant 0 : i32
    return %arg0, %arg1, %c0_i32 : i32, i32, i32
  }
  func.func @transform_1(%arg0: i32, %arg1: i32) -> (i32, i32, i32) {
    %c0_i32 = arith.constant 0 : i32
    %c0_i32_0 = arith.constant 0 : i32
    %c0_i32_1 = arith.constant 0 : i32
    %c0_i32_2 = arith.constant 0 : i32
    return %c0_i32, %c0_i32_0, %c0_i32_1 : i32, i32, i32
  }
  func.func @transform_2(%arg0: i32, %arg1: i32) -> (i32, i32, i32) {
    %c0_i32 = arith.constant 0 : i32
    %c0_i32_0 = arith.constant 0 : i32
    %c0_i32_1 = arith.constant 0 : i32
    %c0_i32_2 = arith.constant 0 : i32
    return %c0_i32, %c0_i32_0, %c0_i32_1 : i32, i32, i32
  }
  func.func @transform_3(%arg0: i32, %arg1: i32) -> (i32, i32, i32) {
    %c0_i32 = arith.constant 0 : i32
    %c0_i32_0 = arith.constant 0 : i32
    %c0_i32_1 = arith.constant 0 : i32
    %c0_i32_2 = arith.constant 0 : i32
    return %c0_i32, %c0_i32_0, %c0_i32_1 : i32, i32, i32
  }
  func.func @transform_4(%arg0: i32, %arg1: i32) -> (i32, i32) {
    %c0_i32 = arith.constant 0 : i32
    %c0_i32_0 = arith.constant 0 : i32
    %c0_i32_1 = arith.constant 0 : i32
    return %c0_i32, %c0_i32_0 : i32, i32
  }
  func.func @transform_5(%arg0: i32, %arg1: i32) -> (i32, i32) {
    %c0_i32 = arith.constant 0 : i32
    %c0_i32_0 = arith.constant 0 : i32
    %c0_i32_1 = arith.constant 0 : i32
    return %c0_i32, %c0_i32_0 : i32, i32
  }
  func.func @transform_6(%arg0: i32, %arg1: i32) -> (i32, i32) {
    %c0_i32 = arith.constant 0 : i32
    %c0_i32_0 = arith.constant 0 : i32
    %c0_i32_1 = arith.constant 0 : i32
    return %c0_i32, %c0_i32_0 : i32, i32
  }
  func.func @transform_7(%arg0: i32, %arg1: i32) -> (i32, i32) {
    %c0_i32 = arith.constant 0 : i32
    %c0_i32_0 = arith.constant 0 : i32
    return %arg0, %c0_i32 : i32, i32
  }
}

</mosaic_0001>

<llo_original>
// kernel: tpu_custom_call.1
$region0: #{tpu_custom_call.1}
  #allocation0 [shape = 'u32[]', space=smem, size = 0x4, offset = 0x4, fixed_abs, tag = 'smem constant byte address 0x4 - core index']
  #allocation1 [shape = 'u32[72,128]{1,0:T(1,128)}', space=vmem, size = 0x9000, scoped, tag = 'internal scratch']
  #allocation2 [shape = 'f32[2,32]{1,0:T(2,128)}', space=vmem, size = 0x400, scoped, tag = 'scratch operand']
  #allocation3 [shape = 'f32[8,2,32]{2,1,0:T(2,128)}', space=vmem, size = 0x2000, scoped, tag = 'scratch operand']
  #allocation4 [shape = 'f32[8,2,32]{2,1,0:T(2,128)}', space=vmem, size = 0x2000, scoped, tag = 'scratch operand']
  #allocation5 [shape = 'f32[8,2,32]{2,1,0:T(2,128)}', space=vmem, size = 0x2000, scoped, tag = 'scratch operand']
  #allocation6 [shape = 'f32[1,1]{1,0:T(1,128)S(1)}', space=vmem, size = 0x200, scoped, tag = 'scoped memory for tpu_custom_call.1']
  %s0 = inlined_call_operand.vmem [shape: f32[2,8,4], index: 0, kind: input, shape index: {}]
  %s1 = inlined_call_operand.vmem [shape: f32[3,4,32], index: 1, kind: input, shape index: {}]
  %s2 = inlined_call_operand.hbm [shape: f32[3,32,32], index: 2, kind: input, shape index: {}]
  %s3 = inlined_call_operand.vmem [shape: f32[3,1,32], index: 3, kind: input, shape index: {}]
  %s4 = inlined_call_operand.vmem [shape: f32[1,32], index: 4, kind: input, shape index: {}]
  %s5 = inlined_call_operand.vmem [shape: f32[1,32], index: 5, kind: input, shape index: {}]
  %s6 = inlined_call_operand.<no memory space> [shape: f32[1,1], index: 6, kind: input, shape index: {}]
  %s7 = inlined_call_operand.vmem [shape: f32[2,1], index: 7, kind: output, shape index: {}]
  %s8 = sld [smem:[#allocation0]]
  $region50: #{tpu_custom_call.1} parent=0
    _
  %s10 = ssub.s32 1, %s8
  %s11 = scalar_select 0, %s10, %s8
  %v12 = vstv %s6
  %13 = vst [vmem:[#allocation6] sm:$0x1] %v12
  $region1: #{tpu_custom_call.1} parent=0
    #allocation7 [shape = 'u8[49152]{0}', space=vmem, size = 0xc000, scoped, tag = 'input window, operand 2, single buffered']
    #allocation8 [shape = 's32[1]{0}', space=sflag, size = 0x4, scoped, tag = 'scoped memory for tpu_custom_call.1']
    %14 = vsyncpa [#allocation8], 0
    // Predicated region
    $region2: #{tpu_custom_call.1} parent=1 // pred_check
      _
    $region3: #{tpu_custom_call.1} parent=1 // pred_check_branch
      %16 = sbr.rel (0) target = $region5
    $region4: #{tpu_custom_call.1} parent=1 // pred_region
      _
    $region5: #{tpu_custom_call.1} parent=1 // pred_fallthru
      _
    // Predicated region
    $region6: #{tpu_custom_call.1} parent=1 // pred_check
      _
    $region7: #{tpu_custom_call.1} parent=1 // pred_check_branch
      %18 = sbr.rel (0) target = $region9
    $region8: #{tpu_custom_call.1} parent=1 // pred_region
      _
    $region9: #{tpu_custom_call.1} parent=1 // pred_fallthru
      _
    // Predicated region
    $region10: #{tpu_custom_call.1} parent=1 // pred_check
      _
    $region11: #{tpu_custom_call.1} parent=1 // pred_check_branch
      %20 = sbr.rel (0) target = $region13
    $region12: #{tpu_custom_call.1} parent=1 // pred_region
      %22 = vsyncadd [#allocation8], 0
      %s23 = sshll.u32 %s2, 4
      %s24 = int_to_ptr.hbm [resolvable:$true] %s23
      %s25 = sshll.u32 [#allocation7], 4
      %s26 = int_to_ptr.vmem [resolvable:$true] %s25
      %31 = dma.hbm_to_vmem [thread:$0]  %s24, 1536, %s26, [#allocation8], 128, 128, 8
    $region13: #{tpu_custom_call.1} parent=1 // pred_fallthru
      _
    // Predicated region
    $region14: #{tpu_custom_call.1} parent=1 // pred_check
      _
    $region15: #{tpu_custom_call.1} parent=1 // pred_check_branch
      %33 = sbr.rel (0) target = $region17
    $region16: #{tpu_custom_call.1} parent=1 // pred_region
      _
    $region17: #{tpu_custom_call.1} parent=1 // pred_fallthru
      _
    // Predicated region
    $region18: #{tpu_custom_call.1} parent=1 // pred_check
      _
    $region19: #{tpu_custom_call.1} parent=1 // pred_check_branch
      %35 = sbr.rel (0) target = $region21
    $region20: #{tpu_custom_call.1} parent=1 // pred_region
      _
    $region21: #{tpu_custom_call.1} parent=1 // pred_fallthru
      _
    // Predicated region
    $region22: #{tpu_custom_call.1} parent=1 // pred_check
      _
    $region23: #{tpu_custom_call.1} parent=1 // pred_check_branch
      %37 = sbr.rel (0) target = $region25
    $region24: #{tpu_custom_call.1} parent=1 // pred_region
      _
    $region25: #{tpu_custom_call.1} parent=1 // pred_fallthru
      _
    // Predicated region
    $region26: #{tpu_custom_call.1} parent=1 // pred_check
      _
    $region27: #{tpu_custom_call.1} parent=1 // pred_check_branch
      %39 = sbr.rel (0) target = $region29
    $region28: #{tpu_custom_call.1} parent=1 // pred_region
      _
    $region29: #{tpu_custom_call.1} parent=1 // pred_fallthru
      _
    // Predicated region
    $region30: #{tpu_custom_call.1} parent=1 // pred_check
      _
    $region31: #{tpu_custom_call.1} parent=1 // pred_check_branch
      %41 = sbr.rel (0) target = $region33
    $region32: #{tpu_custom_call.1} parent=1 // pred_region
      %43 = dma.done [#allocation8], 1536
    $region33: #{tpu_custom_call.1} parent=1 // pred_fallthru
      _
    %p44 = scmp.eq.s32.totalorder 0, 0
    // Predicated region
    $region34: #{tpu_custom_call.1} parent=1 // pred_check
      %p45 = pneg %p44
    $region35: #{tpu_custom_call.1} parent=1 // pred_check_branch
      %47 = sbr.rel (%p45) target = $region37
    $region36: #{tpu_custom_call.1} parent=1 // pred_region
      %vm48 = vcmask 254976
      %49 = vst.msk [vmem:[#allocation2] sm:$0x3] %vm48, 0.0
    $region37: #{tpu_custom_call.1} parent=1 // pred_fallthru
      _
    %v50 = vld [vmem:[%s0] sm:$0xff]
    %v51 = vld [vmem:[%s0 + $0x8] sm:$0xff]
    %v52 = vrot.slane %v50, 4
    %vm53 = vcmask 1047556
    %v54 = vsel %vm53, 0.0, %v52
    %v56 = vunpack.c.l.s4 1983009808
    %v57 = vunpack.c.0.s8 %v56
    %v58 = vperm.slane %v50, %v57
    %v60 = vunpack.c.l.s4 1983009808
    %v61 = vunpack.c.0.s8 %v60
    %v62 = vperm.slane %v54, %v61
    %v63 = vrot.slane %v51, 4
    %v64 = vsel %vm53, 0.0, %v63
    %v66 = vunpack.c.l.s4 1983009808
    %v67 = vunpack.c.0.s8 %v66
    %v68 = vperm.slane %v51, %v67
    %v70 = vunpack.c.l.s4 1983009808
    %v71 = vunpack.c.0.s8 %v70
    %v72 = vperm.slane %v64, %v71
    %v73 = vrot.slane %v68, 4
    %v74 = vsel %vm53, %v73, %v58
    %v75 = vrot.slane %v58, 4
    %v76 = vsel %vm53, %v68, %v75
    %v78 = vunpack.c.l.s4 1934713408
    %v79 = vunpack.c.0.s8 %v78
    %v80 = vperm.slane %v74, %v79
    %v82 = vunpack.c.l.s4 1934713408
    %v83 = vunpack.c.0.s8 %v82
    %v84 = vperm.slane %v76, %v83
    %v85 = vrot.slane %v72, 4
    %v86 = vsel %vm53, %v85, %v62
    %v87 = vrot.slane %v62, 4
    %v88 = vsel %vm53, %v72, %v87
    %v90 = vunpack.c.l.s4 1934713408
    %v91 = vunpack.c.0.s8 %v90
    %v92 = vperm.slane %v86, %v91
    %v94 = vunpack.c.l.s4 1934713408
    %v95 = vunpack.c.0.s8 %v94
    %v96 = vperm.slane %v88, %v95
    %v97 = vrot.slane %v80, 4
    %v98 = vsel %vm53, 0.0, %v97
    %v99 = vrot.slane %v84, 4
    %v100 = vsel %vm53, 0.0, %v99
    %v101 = vrot.slane %v92, 4
    %v102 = vsel %vm53, 0.0, %v101
    %v103 = vrot.slane %v96, 4
    %v104 = vsel %vm53, 0.0, %v103
    %v105 = vld [vmem:[%s1] sm:$0xf]
    %v106 = vld [vmem:[%s3] sm:$0x1]
    %v108 = vperm.slane %v106, 0
    %118 = vst [vmem:[#allocation1] ss:$4 sm:$0xff] %v80
    %s119 = scalar_lea.vmem [#allocation1], 1
    %120 = vst [vmem:[%s119] ss:$4 sm:$0xff] %v98
    %s121 = scalar_lea.vmem [#allocation1], 2
    %122 = vst [vmem:[%s121] ss:$4 sm:$0xff] %v84
    %s123 = scalar_lea.vmem [#allocation1], 3
    %124 = vst [vmem:[%s123] ss:$4 sm:$0xff] %v100
    %s125 = scalar_lea.vmem [#allocation1], 32
    %126 = vst [vmem:[%s125] ss:$4 sm:$0xff] %v92
    %s127 = scalar_lea.vmem [#allocation1], 33
    %128 = vst [vmem:[%s127] ss:$4 sm:$0xff] %v102
    %s129 = scalar_lea.vmem [#allocation1], 34
    %130 = vst [vmem:[%s129] ss:$4 sm:$0xff] %v96
    %s131 = scalar_lea.vmem [#allocation1], 35
    %132 = vst [vmem:[%s131] ss:$4 sm:$0xff] %v104
    %v133 = vld.sshfl [vmem:[#allocation1] sm:$0xff pattern:$0x73625140]
    %v134 = vld.sshfl [vmem:[#allocation1 + $0x20] sm:$0xff pattern:$0x73625140]
    %vm135 = vcmask 31744
    %v136 = vsel %vm135, %v133, 0
    %v138 = vsel %vm135, %v134, 0
    %vm140 = vcmask 1043456
    %v142 = vsel %vm140, %v105, 0
    %144 = vmatpush.msra.mxu0 0.0
    %145 = vmatpush.msra.mxu0 0.0
    %146 = vmatpush.msra.mxu0 0.0
    %147 = vmatpush.msra.mxu0 0.0
    %148 = vmatpush.msra.mxu0 0.0
    %149 = vmatpush.msra.mxu0 0.0
    %150 = vmatpush.msra.mxu0 0.0
    %151 = vmatpush.msra.mxu0 0.0
    %152 = vmatpush.msra.mxu0 0.0
    %153 = vmatpush.msra.mxu0 0.0
    %154 = vmatpush.msra.mxu0 0.0
    %155 = vmatpush.msra.mxu0 0.0
    %156 = vmatpush.msra.mxu0 0.0
    %157 = vmatpush.msra.mxu0 0.0
    %158 = vmatpush.msra.mxu0 0.0
    %159 = vmatpush.msra.mxu0 %v142
    %160 = vmatmul.f32.gmra.mxu0 %v136
    %v161 = vpop.f32.mrf.mxu0
    %v162 = vadd.f32 %v108, %v161
    %163 = vmatmul.f32.gmra.mxu0 %v138
    %v164 = vpop.f32.mrf.mxu0
    %v165 = vadd.f32 %v108, %v164
    %166 = vdwg.mxu0
    %v169 = vrot.slane %v162, 2
    %v170 = vrot.slane %v162, 4
    %v171 = vrot.slane %v162, 6
    %v172 = vrot.slane %v165, 2
    %v173 = vrot.slane %v165, 4
    %v174 = vrot.slane %v165, 6
    %vm181 = vcmask 254976
    %182 = vst.msk [vmem:[#allocation3] sm:$0x3] %vm181, %v162
    %183 = vst.msk [vmem:[#allocation3 + $0x2] sm:$0x3] %vm181, %v169
    %184 = vst.msk [vmem:[#allocation3 + $0x4] sm:$0x3] %vm181, %v170
    %185 = vst.msk [vmem:[#allocation3 + $0x6] sm:$0x3] %vm181, %v171
    %186 = vst.msk [vmem:[#allocation3 + $0x8] sm:$0x3] %vm181, %v165
    %187 = vst.msk [vmem:[#allocation3 + $0xa] sm:$0x3] %vm181, %v172
    %188 = vst.msk [vmem:[#allocation3 + $0xc] sm:$0x3] %vm181, %v173
    %189 = vst.msk [vmem:[#allocation3 + $0xe] sm:$0x3] %vm181, %v174
    %s190 = scalar_lea.vmem %s1, 4
    %v191 = vld [vmem:[%s190] sm:$0xf]
    %s192 = scalar_lea.vmem %s3, 1
    %v193 = vld [vmem:[%s192] sm:$0x1]
    %v195 = vperm.slane %v193, 0
    %197 = vst [vmem:[#allocation1] ss:$4 sm:$0xff] %v80
    %s198 = scalar_lea.vmem [#allocation1], 1
    %199 = vst [vmem:[%s198] ss:$4 sm:$0xff] %v98
    %s200 = scalar_lea.vmem [#allocation1], 2
    %201 = vst [vmem:[%s200] ss:$4 sm:$0xff] %v84
    %s202 = scalar_lea.vmem [#allocation1], 3
    %203 = vst [vmem:[%s202] ss:$4 sm:$0xff] %v100
    %s204 = scalar_lea.vmem [#allocation1], 32
    %205 = vst [vmem:[%s204] ss:$4 sm:$0xff] %v92
    %s206 = scalar_lea.vmem [#allocation1], 33
    %207 = vst [vmem:[%s206] ss:$4 sm:$0xff] %v102
    %s208 = scalar_lea.vmem [#allocation1], 34
    %209 = vst [vmem:[%s208] ss:$4 sm:$0xff] %v96
    %s210 = scalar_lea.vmem [#allocation1], 35
    %211 = vst [vmem:[%s210] ss:$4 sm:$0xff] %v104
    %v212 = vld.sshfl [vmem:[#allocation1] sm:$0xff pattern:$0x73625140]
    %v213 = vld.sshfl [vmem:[#allocation1 + $0x20] sm:$0xff pattern:$0x73625140]
    %v214 = vsel %vm135, %v212, 0
    %v216 = vsel %vm135, %v213, 0
    %v219 = vsel %vm140, %v191, 0
    %221 = vmatpush.msra.mxu0 0.0
    %222 = vmatpush.msra.mxu0 0.0
    %223 = vmatpush.msra.mxu0 0.0
    %224 = vmatpush.msra.mxu0 0.0
    %225 = vmatpush.msra.mxu0 0.0
    %226 = vmatpush.msra.mxu0 0.0
    %227 = vmatpush.msra.mxu0 0.0
    %228 = vmatpush.msra.mxu0 0.0
    %229 = vmatpush.msra.mxu0 0.0
    %230 = vmatpush.msra.mxu0 0.0
    %231 = vmatpush.msra.mxu0 0.0
    %232 = vmatpush.msra.mxu0 0.0
    %233 = vmatpush.msra.mxu0 0.0
    %234 = vmatpush.msra.mxu0 0.0
    %235 = vmatpush.msra.mxu0 0.0
    %236 = vmatpush.msra.mxu0 %v219
    %237 = vmatmul.f32.gmra.mxu0 %v214
    %v238 = vpop.f32.mrf.mxu0
    %v239 = vadd.f32 %v195, %v238
    %240 = vmatmul.f32.gmra.mxu0 %v216
    %v241 = vpop.f32.mrf.mxu0
    %v242 = vadd.f32 %v195, %v241
    %243 = vdwg.mxu0
    %v246 = vrot.slane %v239, 2
    %v247 = vrot.slane %v239, 4
    %v248 = vrot.slane %v239, 6
    %v249 = vrot.slane %v242, 2
    %v250 = vrot.slane %v242, 4
    %v251 = vrot.slane %v242, 6
    %258 = vst.msk [vmem:[#allocation4] sm:$0x3] %vm181, %v239
    %259 = vst.msk [vmem:[#allocation4 + $0x2] sm:$0x3] %vm181, %v246
    %260 = vst.msk [vmem:[#allocation4 + $0x4] sm:$0x3] %vm181, %v247
    %261 = vst.msk [vmem:[#allocation4 + $0x6] sm:$0x3] %vm181, %v248
    %262 = vst.msk [vmem:[#allocation4 + $0x8] sm:$0x3] %vm181, %v242
    %263 = vst.msk [vmem:[#allocation4 + $0xa] sm:$0x3] %vm181, %v249
    %264 = vst.msk [vmem:[#allocation4 + $0xc] sm:$0x3] %vm181, %v250
    %265 = vst.msk [vmem:[#allocation4 + $0xe] sm:$0x3] %vm181, %v251
    %s266 = scalar_lea.vmem %s1, 8
    %v267 = vld [vmem:[%s266] sm:$0xf]
    %s268 = scalar_lea.vmem %s3, 2
    %v269 = vld [vmem:[%s268] sm:$0x1]
    %v271 = vperm.slane %v269, 0
    %273 = vst [vmem:[#allocation1] ss:$4 sm:$0xff] %v80
    %s274 = scalar_lea.vmem [#allocation1], 1
    %275 = vst [vmem:[%s274] ss:$4 sm:$0xff] %v98
    %s276 = scalar_lea.vmem [#allocation1], 2
    %277 = vst [vmem:[%s276] ss:$4 sm:$0xff] %v84
    %s278 = scalar_lea.vmem [#allocation1], 3
    %279 = vst [vmem:[%s278] ss:$4 sm:$0xff] %v100
    %s280 = scalar_lea.vmem [#allocation1], 32
    %281 = vst [vmem:[%s280] ss:$4 sm:$0xff] %v92
    %s282 = scalar_lea.vmem [#allocation1], 33
    %283 = vst [vmem:[%s282] ss:$4 sm:$0xff] %v102
    %s284 = scalar_lea.vmem [#allocation1], 34
    %285 = vst [vmem:[%s284] ss:$4 sm:$0xff] %v96
    %s286 = scalar_lea.vmem [#allocation1], 35
    %287 = vst [vmem:[%s286] ss:$4 sm:$0xff] %v104
    %v288 = vld.sshfl [vmem:[#allocation1] sm:$0xff pattern:$0x73625140]
    %v289 = vld.sshfl [vmem:[#allocation1 + $0x20] sm:$0xff pattern:$0x73625140]
    %v290 = vsel %vm135, %v288, 0
    %v292 = vsel %vm135, %v289, 0
    %v295 = vsel %vm140, %v267, 0
    %297 = vmatpush.msra.mxu0 0.0
    %298 = vmatpush.msra.mxu0 0.0
    %299 = vmatpush.msra.mxu0 0.0
    %300 = vmatpush.msra.mxu0 0.0
    %301 = vmatpush.msra.mxu0 0.0
    %302 = vmatpush.msra.mxu0 0.0
    %303 = vmatpush.msra.mxu0 0.0
    %304 = vmatpush.msra.mxu0 0.0
    %305 = vmatpush.msra.mxu0 0.0
    %306 = vmatpush.msra.mxu0 0.0
    %307 = vmatpush.msra.mxu0 0.0
    %308 = vmatpush.msra.mxu0 0.0
    %309 = vmatpush.msra.mxu0 0.0
    %310 = vmatpush.msra.mxu0 0.0
    %311 = vmatpush.msra.mxu0 0.0
    %312 = vmatpush.msra.mxu0 %v295
    %313 = vmatmul.f32.gmra.mxu0 %v290
    %v314 = vpop.f32.mrf.mxu0
    %v315 = vadd.f32 %v271, %v314
    %316 = vmatmul.f32.gmra.mxu0 %v292
    %v317 = vpop.f32.mrf.mxu0
    %v318 = vadd.f32 %v271, %v317
    %319 = vdwg.mxu0
    %v322 = vrot.slane %v315, 2
    %v323 = vrot.slane %v315, 4
    %v324 = vrot.slane %v315, 6
    %v325 = vrot.slane %v318, 2
    %v326 = vrot.slane %v318, 4
    %v327 = vrot.slane %v318, 6
    %334 = vst.msk [vmem:[#allocation5] sm:$0x3] %vm181, %v315
    %335 = vst.msk [vmem:[#allocation5 + $0x2] sm:$0x3] %vm181, %v322
    %336 = vst.msk [vmem:[#allocation5 + $0x4] sm:$0x3] %vm181, %v323
    %337 = vst.msk [vmem:[#allocation5 + $0x6] sm:$0x3] %vm181, %v324
    %338 = vst.msk [vmem:[#allocation5 + $0x8] sm:$0x3] %vm181, %v318
    %339 = vst.msk [vmem:[#allocation5 + $0xa] sm:$0x3] %vm181, %v325
    %340 = vst.msk [vmem:[#allocation5 + $0xc] sm:$0x3] %vm181, %v326
    %341 = vst.msk [vmem:[#allocation5 + $0xe] sm:$0x3] %vm181, %v327
    %v342 = vld [vmem:[%s4] sm:$0x1]
    %v343 = vld [vmem:[#allocation7] sm:$0xff]
    %v344 = vld [vmem:[#allocation7 + $0x8] sm:$0xff]
    %v345 = vld [vmem:[#allocation7 + $0x10] sm:$0xff]
    %v346 = vld [vmem:[#allocation7 + $0x18] sm:$0xff]
    %s347 = scalar_lea.vmem [#allocation7], 32
    %v348 = vld [vmem:[%s347] sm:$0xff]
    %v349 = vld [vmem:[%s347 + $0x8] sm:$0xff]
    %v350 = vld [vmem:[%s347 + $0x10] sm:$0xff]
    %v351 = vld [vmem:[%s347 + $0x18] sm:$0xff]
    %s352 = scalar_lea.vmem [#allocation7], 64
    %v353 = vld [vmem:[%s352] sm:$0xff]
    %v354 = vld [vmem:[%s352 + $0x8] sm:$0xff]
    %v355 = vld [vmem:[%s352 + $0x10] sm:$0xff]
    %v356 = vld [vmem:[%s352 + $0x18] sm:$0xff]
    %v357 = vld [vmem:[#allocation2] sm:$0x3]
    %vm358 = vcmask 261120
    %v360 = vsel %vm358, %v357, 0
    %362 = vmatpush.msra.mxu0 0.0
    %363 = vmatpush.msra.mxu0 0.0
    %364 = vmatpush.msra.mxu0 0.0
    %365 = vmatpush.msra.mxu0 0.0
    %366 = vmatpush.msra.mxu0 0.0
    %367 = vmatpush.msra.mxu0 0.0
    %368 = vmatpush.msra.mxu0 0.0
    %369 = vmatpush.msra.mxu0 0.0
    %370 = vmatpush.msra.mxu0 0.0
    %371 = vmatpush.msra.mxu0 0.0
    %372 = vmatpush.msra.mxu0 0.0
    %373 = vmatpush.msra.mxu0 0.0
    %374 = vmatpush.msra.mxu0 %v346
    %375 = vmatpush.msra.mxu0 %v345
    %376 = vmatpush.msra.mxu0 %v344
    %377 = vmatpush.msra.mxu0 %v343
    %378 = vmatmul.f32.gmra.mxu0 %v360
    %v379 = vpop.f32.mrf.mxu0
    %v380 = vadd.f32 0.0, %v379
    %381 = vdwg.mxu0
    %382 = vmatpush.msra.mxu0 0.0
    %383 = vmatpush.msra.mxu0 0.0
    %384 = vmatpush.msra.mxu0 0.0
    %385 = vmatpush.msra.mxu0 0.0
    %386 = vmatpush.msra.mxu0 0.0
    %387 = vmatpush.msra.mxu0 0.0
    %388 = vmatpush.msra.mxu0 0.0
    %389 = vmatpush.msra.mxu0 0.0
    %390 = vmatpush.msra.mxu0 0.0
    %391 = vmatpush.msra.mxu0 0.0
    %392 = vmatpush.msra.mxu0 0.0
    %393 = vmatpush.msra.mxu0 0.0
    %394 = vmatpush.msra.mxu0 %v351
    %395 = vmatpush.msra.mxu0 %v350
    %396 = vmatpush.msra.mxu0 %v349
    %397 = vmatpush.msra.mxu0 %v348
    %398 = vmatmul.f32.gmra.mxu0 %v360
    %v399 = vpop.f32.mrf.mxu0
    %v400 = vadd.f32 0.0, %v399
    %401 = vdwg.mxu0
    %v402 = vld [vmem:[#allocation3] sm:$0x3]
    %v403 = vadd.f32 %v402, %v380
    %v404 = vxor.u32 %v403, 2147483648
    %v405 = vmul.f32 %v404, 1.442695
    %v406 = vpow.pop %v405
    %v407 = vadd.f32 %v406, 1.0
    %v408 = vrcp.pop %v407
    %v409 = vmul.f32 %v407, %v408
    %v410 = vsub.f32 1.0, %v409
    %v411 = vmul.f32 %v408, %v410
    %v412 = vadd.f32 %v408, %v411
    %vm413 = vweird.f32 %v407
    %vm414 = vweird.f32 %v408
    %vm415 = vmor %vm413, %vm414
    %v416 = vsel %vm415, %v408, %v412
    %v417 = vand.u32 2147483647, %v407
    %vm418 = vcmp.eq.f32.partialorder %v417, 8.507059e+37
    %v419 = vand.u32 %v407, 2147483648
    %v420 = vor.u32 1.1754944e-38, %v419
    %v421 = vsel %vm418, %v420, %v416
    %v422 = vmul.f32 1.0, %v421
    %v423 = vld [vmem:[#allocation4] sm:$0x3]
    %v424 = vadd.f32 %v423, %v400
    %v425 = vxor.u32 %v424, 2147483648
    %v426 = vmul.f32 %v425, 1.442695
    %v427 = vpow.pop %v426
    %v428 = vadd.f32 %v427, 1.0
    %v429 = vrcp.pop %v428
    %v430 = vmul.f32 %v428, %v429
    %v431 = vsub.f32 1.0, %v430
    %v432 = vmul.f32 %v429, %v431
    %v433 = vadd.f32 %v429, %v432
    %vm434 = vweird.f32 %v428
    %vm435 = vweird.f32 %v429
    %vm436 = vmor %vm434, %vm435
    %v437 = vsel %vm436, %v429, %v433
    %v438 = vand.u32 2147483647, %v428
    %vm439 = vcmp.eq.f32.partialorder %v438, 8.507059e+37
    %v440 = vand.u32 %v428, 2147483648
    %v441 = vor.u32 1.1754944e-38, %v440
    %v442 = vsel %vm439, %v441, %v437
    %v443 = vmul.f32 1.0, %v442
    %v444 = vld [vmem:[#allocation5] sm:$0x3]
    %v446 = vperm.slane %v342, 0
    %448 = vmatpush.msra.mxu0 0.0
    %449 = vmatpush.msra.mxu0 0.0
    %450 = vmatpush.msra.mxu0 0.0
    %451 = vmatpush.msra.mxu0 0.0
    %452 = vmatpush.msra.mxu0 0.0
    %453 = vmatpush.msra.mxu0 0.0
    %454 = vmatpush.msra.mxu0 0.0
    %455 = vmatpush.msra.mxu0 0.0
    %456 = vmatpush.msra.mxu0 0.0
    %457 = vmatpush.msra.mxu0 0.0
    %458 = vmatpush.msra.mxu0 0.0
    %459 = vmatpush.msra.mxu0 0.0
    %460 = vmatpush.msra.mxu0 %v356
    %461 = vmatpush.msra.mxu0 %v355
    %462 = vmatpush.msra.mxu0 %v354
    %463 = vmatpush.msra.mxu0 %v353
    %464 = vmatmul.f32.gmra.mxu0 %v360
    %v465 = vpop.f32.mrf.mxu0
    %v466 = vadd.f32 %v446, %v465
    %467 = vdwg.mxu0
    %v468 = vmul.f32 %v422, %v466
    %v469 = vadd.f32 %v444, %v468
    %v470 = vtanh.pop %v469
    %v471 = vsub.f32 1.0, %v443
    %v472 = vmul.f32 %v471, %v470
    %v473 = vmul.f32 %v443, %v357
    %v474 = vadd.f32 %v472, %v473
    %v476 = vsel %vm358, %v474, 0
    %478 = vmatpush.msra.mxu0 0.0
    %479 = vmatpush.msra.mxu0 0.0
    %480 = vmatpush.msra.mxu0 0.0
    %481 = vmatpush.msra.mxu0 0.0
    %482 = vmatpush.msra.mxu0 0.0
    %483 = vmatpush.msra.mxu0 0.0
    %484 = vmatpush.msra.mxu0 0.0
    %485 = vmatpush.msra.mxu0 0.0
    %486 = vmatpush.msra.mxu0 0.0
    %487 = vmatpush.msra.mxu0 0.0
    %488 = vmatpush.msra.mxu0 0.0
    %489 = vmatpush.msra.mxu0 0.0
    %490 = vmatpush.msra.mxu0 %v346
    %491 = vmatpush.msra.mxu0 %v345
    %492 = vmatpush.msra.mxu0 %v344
    %493 = vmatpush.msra.mxu0 %v343
    %494 = vmatmul.f32.gmra.mxu0 %v476
    %v495 = vpop.f32.mrf.mxu0
    %v496 = vadd.f32 0.0, %v495
    %497 = vdwg.mxu0
    %498 = vmatpush.msra.mxu0 0.0
    %499 = vmatpush.msra.mxu0 0.0
    %500 = vmatpush.msra.mxu0 0.0
    %501 = vmatpush.msra.mxu0 0.0
    %502 = vmatpush.msra.mxu0 0.0
    %503 = vmatpush.msra.mxu0 0.0
    %504 = vmatpush.msra.mxu0 0.0
    %505 = vmatpush.msra.mxu0 0.0
    %506 = vmatpush.msra.mxu0 0.0
    %507 = vmatpush.msra.mxu0 0.0
    %508 = vmatpush.msra.mxu0 0.0
    %509 = vmatpush.msra.mxu0 0.0
    %510 = vmatpush.msra.mxu0 %v351
    %511 = vmatpush.msra.mxu0 %v350
    %512 = vmatpush.msra.mxu0 %v349
    %513 = vmatpush.msra.mxu0 %v348
    %514 = vmatmul.f32.gmra.mxu0 %v476
    %v515 = vpop.f32.mrf.mxu0
    %v516 = vadd.f32 0.0, %v515
    %517 = vdwg.mxu0
    %s518 = scalar_lea.vmem [#allocation3], 2
    %v519 = vld [vmem:[%s518] sm:$0x3]
    %v520 = vadd.f32 %v519, %v496
    %v521 = vxor.u32 %v520, 2147483648
    %v522 = vmul.f32 %v521, 1.442695
    %v523 = vpow.pop %v522
    %v524 = vadd.f32 %v523, 1.0
    %v525 = vrcp.pop %v524
    %v526 = vmul.f32 %v524, %v525
    %v527 = vsub.f32 1.0, %v526
    %v528 = vmul.f32 %v525, %v527
    %v529 = vadd.f32 %v525, %v528
    %vm530 = vweird.f32 %v524
    %vm531 = vweird.f32 %v525
    %vm532 = vmor %vm530, %vm531
    %v533 = vsel %vm532, %v525, %v529
    %v534 = vand.u32 2147483647, %v524
    %vm535 = vcmp.eq.f32.partialorder %v534, 8.507059e+37
    %v536 = vand.u32 %v524, 2147483648
    %v537 = vor.u32 1.1754944e-38, %v536
    %v538 = vsel %vm535, %v537, %v533
    %v539 = vmul.f32 1.0, %v538
    %s540 = scalar_lea.vmem [#allocation4], 2
    %v541 = vld [vmem:[%s540] sm:$0x3]
    %v542 = vadd.f32 %v541, %v516
    %v543 = vxor.u32 %v542, 2147483648
    %v544 = vmul.f32 %v543, 1.442695
    %v545 = vpow.pop %v544
    %v546 = vadd.f32 %v545, 1.0
    %v547 = vrcp.pop %v546
    %v548 = vmul.f32 %v546, %v547
    %v549 = vsub.f32 1.0, %v548
    %v550 = vmul.f32 %v547, %v549
    %v551 = vadd.f32 %v547, %v550
    %vm552 = vweird.f32 %v546
    %vm553 = vweird.f32 %v547
    %vm554 = vmor %vm552, %vm553
    %v555 = vsel %vm554, %v547, %v551
    %v556 = vand.u32 2147483647, %v546
    %vm557 = vcmp.eq.f32.partialorder %v556, 8.507059e+37
    %v558 = vand.u32 %v546, 2147483648
    %v559 = vor.u32 1.1754944e-38, %v558
    %v560 = vsel %vm557, %v559, %v555
    %v561 = vmul.f32 1.0, %v560
    %s562 = scalar_lea.vmem [#allocation5], 2
    %v563 = vld [vmem:[%s562] sm:$0x3]
    %564 = vmatpush.msra.mxu0 0.0
    %565 = vmatpush.msra.mxu0 0.0
    %566 = vmatpush.msra.mxu0 0.0
    %567 = vmatpush.msra.mxu0 0.0
    %568 = vmatpush.msra.mxu0 0.0
    %569 = vmatpush.msra.mxu0 0.0
    %570 = vmatpush.msra.mxu0 0.0
    %571 = vmatpush.msra.mxu0 0.0
    %572 = vmatpush.msra.mxu0 0.0
    %573 = vmatpush.msra.mxu0 0.0
    %574 = vmatpush.msra.mxu0 0.0
    %575 = vmatpush.msra.mxu0 0.0
    %576 = vmatpush.msra.mxu0 %v356
    %577 = vmatpush.msra.mxu0 %v355
    %578 = vmatpush.msra.mxu0 %v354
    %579 = vmatpush.msra.mxu0 %v353
    %580 = vmatmul.f32.gmra.mxu0 %v476
    %v581 = vpop.f32.mrf.mxu0
    %v582 = vadd.f32 %v446, %v581
    %583 = vdwg.mxu0
    %v584 = vmul.f32 %v539, %v582
    %v585 = vadd.f32 %v563, %v584
    %v586 = vtanh.pop %v585
    %v587 = vsub.f32 1.0, %v561
    %v588 = vmul.f32 %v587, %v586
    %v589 = vmul.f32 %v561, %v474
    %v590 = vadd.f32 %v588, %v589
    %v592 = vsel %vm358, %v590, 0
    %594 = vmatpush.msra.mxu0 0.0
    %595 = vmatpush.msra.mxu0 0.0
    %596 = vmatpush.msra.mxu0 0.0
    %597 = vmatpush.msra.mxu0 0.0
    %598 = vmatpush.msra.mxu0 0.0
    %599 = vmatpush.msra.mxu0 0.0
    %600 = vmatpush.msra.mxu0 0.0
    %601 = vmatpush.msra.mxu0 0.0
    %602 = vmatpush.msra.mxu0 0.0
    %603 = vmatpush.msra.mxu0 0.0
    %604 = vmatpush.msra.mxu0 0.0
    %605 = vmatpush.msra.mxu0 0.0
    %606 = vmatpush.msra.mxu0 %v346
    %607 = vmatpush.msra.mxu0 %v345
    %608 = vmatpush.msra.mxu0 %v344
    %609 = vmatpush.msra.mxu0 %v343
    %610 = vmatmul.f32.gmra.mxu0 %v592
    %v611 = vpop.f32.mrf.mxu0
    %v612 = vadd.f32 0.0, %v611
    %613 = vdwg.mxu0
    %614 = vmatpush.msra.mxu0 0.0
    %615 = vmatpush.msra.mxu0 0.0
    %616 = vmatpush.msra.mxu0 0.0
    %617 = vmatpush.msra.mxu0 0.0
    %618 = vmatpush.msra.mxu0 0.0
    %619 = vmatpush.msra.mxu0 0.0
    %620 = vmatpush.msra.mxu0 0.0
    %621 = vmatpush.msra.mxu0 0.0
    %622 = vmatpush.msra.mxu0 0.0
    %623 = vmatpush.msra.mxu0 0.0
    %624 = vmatpush.msra.mxu0 0.0
    %625 = vmatpush.msra.mxu0 0.0
    %626 = vmatpush.msra.mxu0 %v351
    %627 = vmatpush.msra.mxu0 %v350
    %628 = vmatpush.msra.mxu0 %v349
    %629 = vmatpush.msra.mxu0 %v348
    %630 = vmatmul.f32.gmra.mxu0 %v592
    %v631 = vpop.f32.mrf.mxu0
    %v632 = vadd.f32 0.0, %v631
    %633 = vdwg.mxu0
    %s634 = scalar_lea.vmem [#allocation3], 4
    %v635 = vld [vmem:[%s634] sm:$0x3]
    %v636 = vadd.f32 %v635, %v612
    %v637 = vxor.u32 %v636, 2147483648
    %v638 = vmul.f32 %v637, 1.442695
    %v639 = vpow.pop %v638
    %v640 = vadd.f32 %v639, 1.0
    %v641 = vrcp.pop %v640
    %v642 = vmul.f32 %v640, %v641
    %v643 = vsub.f32 1.0, %v642
    %v644 = vmul.f32 %v641, %v643
    %v645 = vadd.f32 %v641, %v644
    %vm646 = vweird.f32 %v640
    %vm647 = vweird.f32 %v641
    %vm648 = vmor %vm646, %vm647
    %v649 = vsel %vm648, %v641, %v645
    %v650 = vand.u32 2147483647, %v640
    %vm651 = vcmp.eq.f32.partialorder %v650, 8.507059e+37
    %v652 = vand.u32 %v640, 2147483648
    %v653 = vor.u32 1.1754944e-38, %v652
    %v654 = vsel %vm651, %v653, %v649
    %v655 = vmul.f32 1.0, %v654
    %s656 = scalar_lea.vmem [#allocation4], 4
    %v657 = vld [vmem:[%s656] sm:$0x3]
    %v658 = vadd.f32 %v657, %v632
    %v659 = vxor.u32 %v658, 2147483648
    %v660 = vmul.f32 %v659, 1.442695
    %v661 = vpow.pop %v660
    %v662 = vadd.f32 %v661, 1.0
    %v663 = vrcp.pop %v662
    %v664 = vmul.f32 %v662, %v663
    %v665 = vsub.f32 1.0, %v664
    %v666 = vmul.f32 %v663, %v665
    %v667 = vadd.f32 %v663, %v666
    %vm668 = vweird.f32 %v662
    %vm669 = vweird.f32 %v663
    %vm670 = vmor %vm668, %vm669
    %v671 = vsel %vm670, %v663, %v667
    %v672 = vand.u32 2147483647, %v662
    %vm673 = vcmp.eq.f32.partialorder %v672, 8.507059e+37
    %v674 = vand.u32 %v662, 2147483648
    %v675 = vor.u32 1.1754944e-38, %v674
    %v676 = vsel %vm673, %v675, %v671
    %v677 = vmul.f32 1.0, %v676
    %s678 = scalar_lea.vmem [#allocation5], 4
    %v679 = vld [vmem:[%s678] sm:$0x3]
    %680 = vmatpush.msra.mxu0 0.0
    %681 = vmatpush.msra.mxu0 0.0
    %682 = vmatpush.msra.mxu0 0.0
    %683 = vmatpush.msra.mxu0 0.0
    %684 = vmatpush.msra.mxu0 0.0
    %685 = vmatpush.msra.mxu0 0.0
    %686 = vmatpush.msra.mxu0 0.0
    %687 = vmatpush.msra.mxu0 0.0
    %688 = vmatpush.msra.mxu0 0.0
    %689 = vmatpush.msra.mxu0 0.0
    %690 = vmatpush.msra.mxu0 0.0
    %691 = vmatpush.msra.mxu0 0.0
    %692 = vmatpush.msra.mxu0 %v356
    %693 = vmatpush.msra.mxu0 %v355
    %694 = vmatpush.msra.mxu0 %v354
    %695 = vmatpush.msra.mxu0 %v353
    %696 = vmatmul.f32.gmra.mxu0 %v592
    %v697 = vpop.f32.mrf.mxu0
    %v698 = vadd.f32 %v446, %v697
    %699 = vdwg.mxu0
    %v700 = vmul.f32 %v655, %v698
    %v701 = vadd.f32 %v679, %v700
    %v702 = vtanh.pop %v701
    %v703 = vsub.f32 1.0, %v677
    %v704 = vmul.f32 %v703, %v702
    %v705 = vmul.f32 %v677, %v590
    %v706 = vadd.f32 %v704, %v705
    %v708 = vsel %vm358, %v706, 0
    %710 = vmatpush.msra.mxu0 0.0
    %711 = vmatpush.msra.mxu0 0.0
    %712 = vmatpush.msra.mxu0 0.0
    %713 = vmatpush.msra.mxu0 0.0
    %714 = vmatpush.msra.mxu0 0.0
    %715 = vmatpush.msra.mxu0 0.0
    %716 = vmatpush.msra.mxu0 0.0
    %717 = vmatpush.msra.mxu0 0.0
    %718 = vmatpush.msra.mxu0 0.0
    %719 = vmatpush.msra.mxu0 0.0
    %720 = vmatpush.msra.mxu0 0.0
    %721 = vmatpush.msra.mxu0 0.0
    %722 = vmatpush.msra.mxu0 %v346
    %723 = vmatpush.msra.mxu0 %v345
    %724 = vmatpush.msra.mxu0 %v344
    %725 = vmatpush.msra.mxu0 %v343
    %726 = vmatmul.f32.gmra.mxu0 %v708
    %v727 = vpop.f32.mrf.mxu0
    %v728 = vadd.f32 0.0, %v727
    %729 = vdwg.mxu0
    %730 = vmatpush.msra.mxu0 0.0
    %731 = vmatpush.msra.mxu0 0.0
    %732 = vmatpush.msra.mxu0 0.0
    %733 = vmatpush.msra.mxu0 0.0
    %734 = vmatpush.msra.mxu0 0.0
    %735 = vmatpush.msra.mxu0 0.0
    %736 = vmatpush.msra.mxu0 0.0
    %737 = vmatpush.msra.mxu0 0.0
    %738 = vmatpush.msra.mxu0 0.0
    %739 = vmatpush.msra.mxu0 0.0
    %740 = vmatpush.msra.mxu0 0.0
    %741 = vmatpush.msra.mxu0 0.0
    %742 = vmatpush.msra.mxu0 %v351
    %743 = vmatpush.msra.mxu0 %v350
    %744 = vmatpush.msra.mxu0 %v349
    %745 = vmatpush.msra.mxu0 %v348
    %746 = vmatmul.f32.gmra.mxu0 %v708
    %v747 = vpop.f32.mrf.mxu0
    %v748 = vadd.f32 0.0, %v747
    %749 = vdwg.mxu0
    %s750 = scalar_lea.vmem [#allocation3], 6
    %v751 = vld [vmem:[%s750] sm:$0x3]
    %v752 = vadd.f32 %v751, %v728
    %v753 = vxor.u32 %v752, 2147483648
    %v754 = vmul.f32 %v753, 1.442695
    %v755 = vpow.pop %v754
    %v756 = vadd.f32 %v755, 1.0
    %v757 = vrcp.pop %v756
    %v758 = vmul.f32 %v756, %v757
    %v759 = vsub.f32 1.0, %v758
    %v760 = vmul.f32 %v757, %v759
    %v761 = vadd.f32 %v757, %v760
    %vm762 = vweird.f32 %v756
    %vm763 = vweird.f32 %v757
    %vm764 = vmor %vm762, %vm763
    %v765 = vsel %vm764, %v757, %v761
    %v766 = vand.u32 2147483647, %v756
    %vm767 = vcmp.eq.f32.partialorder %v766, 8.507059e+37
    %v768 = vand.u32 %v756, 2147483648
    %v769 = vor.u32 1.1754944e-38, %v768
    %v770 = vsel %vm767, %v769, %v765
    %v771 = vmul.f32 1.0, %v770
    %s772 = scalar_lea.vmem [#allocation4], 6
    %v773 = vld [vmem:[%s772] sm:$0x3]
    %v774 = vadd.f32 %v773, %v748
    %v775 = vxor.u32 %v774, 2147483648
    %v776 = vmul.f32 %v775, 1.442695
    %v777 = vpow.pop %v776
    %v778 = vadd.f32 %v777, 1.0
    %v779 = vrcp.pop %v778
    %v780 = vmul.f32 %v778, %v779
    %v781 = vsub.f32 1.0, %v780
    %v782 = vmul.f32 %v779, %v781
    %v783 = vadd.f32 %v779, %v782
    %vm784 = vweird.f32 %v778
    %vm785 = vweird.f32 %v779
    %vm786 = vmor %vm784, %vm785
    %v787 = vsel %vm786, %v779, %v783
    %v788 = vand.u32 2147483647, %v778
    %vm789 = vcmp.eq.f32.partialorder %v788, 8.507059e+37
    %v790 = vand.u32 %v778, 2147483648
    %v791 = vor.u32 1.1754944e-38, %v790
    %v792 = vsel %vm789, %v791, %v787
    %v793 = vmul.f32 1.0, %v792
    %s794 = scalar_lea.vmem [#allocation5], 6
    %v795 = vld [vmem:[%s794] sm:$0x3]
    %796 = vmatpush.msra.mxu0 0.0
    %797 = vmatpush.msra.mxu0 0.0
    %798 = vmatpush.msra.mxu0 0.0
    %799 = vmatpush.msra.mxu0 0.0
    %800 = vmatpush.msra.mxu0 0.0
    %801 = vmatpush.msra.mxu0 0.0
    %802 = vmatpush.msra.mxu0 0.0
    %803 = vmatpush.msra.mxu0 0.0
    %804 = vmatpush.msra.mxu0 0.0
    %805 = vmatpush.msra.mxu0 0.0
    %806 = vmatpush.msra.mxu0 0.0
    %807 = vmatpush.msra.mxu0 0.0
    %808 = vmatpush.msra.mxu0 %v356
    %809 = vmatpush.msra.mxu0 %v355
    %810 = vmatpush.msra.mxu0 %v354
    %811 = vmatpush.msra.mxu0 %v353
    %812 = vmatmul.f32.gmra.mxu0 %v708
    %v813 = vpop.f32.mrf.mxu0
    %v814 = vadd.f32 %v446, %v813
    %815 = vdwg.mxu0
    %v816 = vmul.f32 %v771, %v814
    %v817 = vadd.f32 %v795, %v816
    %v818 = vtanh.pop %v817
    %v819 = vsub.f32 1.0, %v793
    %v820 = vmul.f32 %v819, %v818
    %v821 = vmul.f32 %v793, %v706
    %v822 = vadd.f32 %v820, %v821
    %v824 = vsel %vm358, %v822, 0
    %826 = vmatpush.msra.mxu0 0.0
    %827 = vmatpush.msra.mxu0 0.0
    %828 = vmatpush.msra.mxu0 0.0
    %829 = vmatpush.msra.mxu0 0.0
    %830 = vmatpush.msra.mxu0 0.0
    %831 = vmatpush.msra.mxu0 0.0
    %832 = vmatpush.msra.mxu0 0.0
    %833 = vmatpush.msra.mxu0 0.0
    %834 = vmatpush.msra.mxu0 0.0
    %835 = vmatpush.msra.mxu0 0.0
    %836 = vmatpush.msra.mxu0 0.0
    %837 = vmatpush.msra.mxu0 0.0
    %838 = vmatpush.msra.mxu0 %v346
    %839 = vmatpush.msra.mxu0 %v345
    %840 = vmatpush.msra.mxu0 %v344
    %841 = vmatpush.msra.mxu0 %v343
    %842 = vmatmul.f32.gmra.mxu0 %v824
    %v843 = vpop.f32.mrf.mxu0
    %v844 = vadd.f32 0.0, %v843
    %845 = vdwg.mxu0
    %846 = vmatpush.msra.mxu0 0.0
    %847 = vmatpush.msra.mxu0 0.0
    %848 = vmatpush.msra.mxu0 0.0
    %849 = vmatpush.msra.mxu0 0.0
    %850 = vmatpush.msra.mxu0 0.0
    %851 = vmatpush.msra.mxu0 0.0
    %852 = vmatpush.msra.mxu0 0.0
    %853 = vmatpush.msra.mxu0 0.0
    %854 = vmatpush.msra.mxu0 0.0
    %855 = vmatpush.msra.mxu0 0.0
    %856 = vmatpush.msra.mxu0 0.0
    %857 = vmatpush.msra.mxu0 0.0
    %858 = vmatpush.msra.mxu0 %v351
    %859 = vmatpush.msra.mxu0 %v350
    %860 = vmatpush.msra.mxu0 %v349
    %861 = vmatpush.msra.mxu0 %v348
    %862 = vmatmul.f32.gmra.mxu0 %v824
    %v863 = vpop.f32.mrf.mxu0
    %v864 = vadd.f32 0.0, %v863
    %865 = vdwg.mxu0
    %s866 = scalar_lea.vmem [#allocation3], 8
    %v867 = vld [vmem:[%s866] sm:$0x3]
    %v868 = vadd.f32 %v867, %v844
    %v869 = vxor.u32 %v868, 2147483648
    %v870 = vmul.f32 %v869, 1.442695
    %v871 = vpow.pop %v870
    %v872 = vadd.f32 %v871, 1.0
    %v873 = vrcp.pop %v872
    %v874 = vmul.f32 %v872, %v873
    %v875 = vsub.f32 1.0, %v874
    %v876 = vmul.f32 %v873, %v875
    %v877 = vadd.f32 %v873, %v876
    %vm878 = vweird.f32 %v872
    %vm879 = vweird.f32 %v873
    %vm880 = vmor %vm878, %vm879
    %v881 = vsel %vm880, %v873, %v877
    %v882 = vand.u32 2147483647, %v872
    %vm883 = vcmp.eq.f32.partialorder %v882, 8.507059e+37
    %v884 = vand.u32 %v872, 2147483648
    %v885 = vor.u32 1.1754944e-38, %v884
    %v886 = vsel %vm883, %v885, %v881
    %v887 = vmul.f32 1.0, %v886
    %s888 = scalar_lea.vmem [#allocation4], 8
    %v889 = vld [vmem:[%s888] sm:$0x3]
    %v890 = vadd.f32 %v889, %v864
    %v891 = vxor.u32 %v890, 2147483648
    %v892 = vmul.f32 %v891, 1.442695
    %v893 = vpow.pop %v892
    %v894 = vadd.f32 %v893, 1.0
    %v895 = vrcp.pop %v894
    %v896 = vmul.f32 %v894, %v895
    %v897 = vsub.f32 1.0, %v896
    %v898 = vmul.f32 %v895, %v897
    %v899 = vadd.f32 %v895, %v898
    %vm900 = vweird.f32 %v894
    %vm901 = vweird.f32 %v895
    %vm902 = vmor %vm900, %vm901
    %v903 = vsel %vm902, %v895, %v899
    %v904 = vand.u32 2147483647, %v894
    %vm905 = vcmp.eq.f32.partialorder %v904, 8.507059e+37
    %v906 = vand.u32 %v894, 2147483648
    %v907 = vor.u32 1.1754944e-38, %v906
    %v908 = vsel %vm905, %v907, %v903
    %v909 = vmul.f32 1.0, %v908
    %s910 = scalar_lea.vmem [#allocation5], 8
    %v911 = vld [vmem:[%s910] sm:$0x3]
    %912 = vmatpush.msra.mxu0 0.0
    %913 = vmatpush.msra.mxu0 0.0
    %914 = vmatpush.msra.mxu0 0.0
    %915 = vmatpush.msra.mxu0 0.0
    %916 = vmatpush.msra.mxu0 0.0
    %917 = vmatpush.msra.mxu0 0.0
    %918 = vmatpush.msra.mxu0 0.0
    %919 = vmatpush.msra.mxu0 0.0
    %920 = vmatpush.msra.mxu0 0.0
    %921 = vmatpush.msra.mxu0 0.0
    %922 = vmatpush.msra.mxu0 0.0
    %923 = vmatpush.msra.mxu0 0.0
    %924 = vmatpush.msra.mxu0 %v356
    %925 = vmatpush.msra.mxu0 %v355
    %926 = vmatpush.msra.mxu0 %v354
    %927 = vmatpush.msra.mxu0 %v353
    %928 = vmatmul.f32.gmra.mxu0 %v824
    %v929 = vpop.f32.mrf.mxu0
    %v930 = vadd.f32 %v446, %v929
    %931 = vdwg.mxu0
    %v932 = vmul.f32 %v887, %v930
    %v933 = vadd.f32 %v911, %v932
    %v934 = vtanh.pop %v933
    %v935 = vsub.f32 1.0, %v909
    %v936 = vmul.f32 %v935, %v934
    %v937 = vmul.f32 %v909, %v822
    %v938 = vadd.f32 %v936, %v937
    %v940 = vsel %vm358, %v938, 0
    %942 = vmatpush.msra.mxu0 0.0
    %943 = vmatpush.msra.mxu0 0.0
    %944 = vmatpush.msra.mxu0 0.0
    %945 = vmatpush.msra.mxu0 0.0
    %946 = vmatpush.msra.mxu0 0.0
    %947 = vmatpush.msra.mxu0 0.0
    %948 = vmatpush.msra.mxu0 0.0
    %949 = vmatpush.msra.mxu0 0.0
    %950 = vmatpush.msra.mxu0 0.0
    %951 = vmatpush.msra.mxu0 0.0
    %952 = vmatpush.msra.mxu0 0.0
    %953 = vmatpush.msra.mxu0 0.0
    %954 = vmatpush.msra.mxu0 %v346
    %955 = vmatpush.msra.mxu0 %v345
    %956 = vmatpush.msra.mxu0 %v344
    %957 = vmatpush.msra.mxu0 %v343
    %958 = vmatmul.f32.gmra.mxu0 %v940
    %v959 = vpop.f32.mrf.mxu0
    %v960 = vadd.f32 0.0, %v959
    %961 = vdwg.mxu0
    %962 = vmatpush.msra.mxu0 0.0
    %963 = vmatpush.msra.mxu0 0.0
    %964 = vmatpush.msra.mxu0 0.0
    %965 = vmatpush.msra.mxu0 0.0
    %966 = vmatpush.msra.mxu0 0.0
    %967 = vmatpush.msra.mxu0 0.0
    %968 = vmatpush.msra.mxu0 0.0
    %969 = vmatpush.msra.mxu0 0.0
    %970 = vmatpush.msra.mxu0 0.0
    %971 = vmatpush.msra.mxu0 0.0
    %972 = vmatpush.msra.mxu0 0.0
    %973 = vmatpush.msra.mxu0 0.0
    %974 = vmatpush.msra.mxu0 %v351
    %975 = vmatpush.msra.mxu0 %v350
    %976 = vmatpush.msra.mxu0 %v349
    %977 = vmatpush.msra.mxu0 %v348
    %978 = vmatmul.f32.gmra.mxu0 %v940
    %v979 = vpop.f32.mrf.mxu0
    %v980 = vadd.f32 0.0, %v979
    %981 = vdwg.mxu0
    %s982 = scalar_lea.vmem [#allocation3], 10
    %v983 = vld [vmem:[%s982] sm:$0x3]
    %v984 = vadd.f32 %v983, %v960
    %v985 = vxor.u32 %v984, 2147483648
    %v986 = vmul.f32 %v985, 1.442695
    %v987 = vpow.pop %v986
    %v988 = vadd.f32 %v987, 1.0
    %v989 = vrcp.pop %v988
    %v990 = vmul.f32 %v988, %v989
    %v991 = vsub.f32 1.0, %v990
    %v992 = vmul.f32 %v989, %v991
    %v993 = vadd.f32 %v989, %v992
    %vm994 = vweird.f32 %v988
    %vm995 = vweird.f32 %v989
    %vm996 = vmor %vm994, %vm995
    %v997 = vsel %vm996, %v989, %v993
    %v998 = vand.u32 2147483647, %v988
    %vm999 = vcmp.eq.f32.partialorder %v998, 8.507059e+37
    %v1000 = vand.u32 %v988, 2147483648
    %v1001 = vor.u32 1.1754944e-38, %v1000
    %v1002 = vsel %vm999, %v1001, %v997
    %v1003 = vmul.f32 1.0, %v1002
    %s1004 = scalar_lea.vmem [#allocation4], 10
    %v1005 = vld [vmem:[%s1004] sm:$0x3]
    %v1006 = vadd.f32 %v1005, %v980
    %v1007 = vxor.u32 %v1006, 2147483648
    %v1008 = vmul.f32 %v1007, 1.442695
    %v1009 = vpow.pop %v1008
    %v1010 = vadd.f32 %v1009, 1.0
    %v1011 = vrcp.pop %v1010
    %v1012 = vmul.f32 %v1010, %v1011
    %v1013 = vsub.f32 1.0, %v1012
    %v1014 = vmul.f32 %v1011, %v1013
    %v1015 = vadd.f32 %v1011, %v1014
    %vm1016 = vweird.f32 %v1010
    %vm1017 = vweird.f32 %v1011
    %vm1018 = vmor %vm1016, %vm1017
    %v1019 = vsel %vm1018, %v1011, %v1015
    %v1020 = vand.u32 2147483647, %v1010
    %vm1021 = vcmp.eq.f32.partialorder %v1020, 8.507059e+37
    %v1022 = vand.u32 %v1010, 2147483648
    %v1023 = vor.u32 1.1754944e-38, %v1022
    %v1024 = vsel %vm1021, %v1023, %v1019
    %v1025 = vmul.f32 1.0, %v1024
    %s1026 = scalar_lea.vmem [#allocation5], 10
    %v1027 = vld [vmem:[%s1026] sm:$0x3]
    %1028 = vmatpush.msra.mxu0 0.0
    %1029 = vmatpush.msra.mxu0 0.0
    %1030 = vmatpush.msra.mxu0 0.0
    %1031 = vmatpush.msra.mxu0 0.0
    %1032 = vmatpush.msra.mxu0 0.0
    %1033 = vmatpush.msra.mxu0 0.0
    %1034 = vmatpush.msra.mxu0 0.0
    %1035 = vmatpush.msra.mxu0 0.0
    %1036 = vmatpush.msra.mxu0 0.0
    %1037 = vmatpush.msra.mxu0 0.0
    %1038 = vmatpush.msra.mxu0 0.0
    %1039 = vmatpush.msra.mxu0 0.0
    %1040 = vmatpush.msra.mxu0 %v356
    %1041 = vmatpush.msra.mxu0 %v355
    %1042 = vmatpush.msra.mxu0 %v354
    %1043 = vmatpush.msra.mxu0 %v353
    %1044 = vmatmul.f32.gmra.mxu0 %v940
    %v1045 = vpop.f32.mrf.mxu0
    %v1046 = vadd.f32 %v446, %v1045
    %1047 = vdwg.mxu0
    %v1048 = vmul.f32 %v1003, %v1046
    %v1049 = vadd.f32 %v1027, %v1048
    %v1050 = vtanh.pop %v1049
    %v1051 = vsub.f32 1.0, %v1025
    %v1052 = vmul.f32 %v1051, %v1050
    %v1053 = vmul.f32 %v1025, %v938
    %v1054 = vadd.f32 %v1052, %v1053
    %v1056 = vsel %vm358, %v1054, 0
    %1058 = vmatpush.msra.mxu0 0.0
    %1059 = vmatpush.msra.mxu0 0.0
    %1060 = vmatpush.msra.mxu0 0.0
    %1061 = vmatpush.msra.mxu0 0.0
    %1062 = vmatpush.msra.mxu0 0.0
    %1063 = vmatpush.msra.mxu0 0.0
    %1064 = vmatpush.msra.mxu0 0.0
    %1065 = vmatpush.msra.mxu0 0.0
    %1066 = vmatpush.msra.mxu0 0.0
    %1067 = vmatpush.msra.mxu0 0.0
    %1068 = vmatpush.msra.mxu0 0.0
    %1069 = vmatpush.msra.mxu0 0.0
    %1070 = vmatpush.msra.mxu0 %v346
    %1071 = vmatpush.msra.mxu0 %v345
    %1072 = vmatpush.msra.mxu0 %v344
    %1073 = vmatpush.msra.mxu0 %v343
    %1074 = vmatmul.f32.gmra.mxu0 %v1056
    %v1075 = vpop.f32.mrf.mxu0
    %v1076 = vadd.f32 0.0, %v1075
    %1077 = vdwg.mxu0
    %1078 = vmatpush.msra.mxu0 0.0
    %1079 = vmatpush.msra.mxu0 0.0
    %1080 = vmatpush.msra.mxu0 0.0
    %1081 = vmatpush.msra.mxu0 0.0
    %1082 = vmatpush.msra.mxu0 0.0
    %1083 = vmatpush.msra.mxu0 0.0
    %1084 = vmatpush.msra.mxu0 0.0
    %1085 = vmatpush.msra.mxu0 0.0
    %1086 = vmatpush.msra.mxu0 0.0
    %1087 = vmatpush.msra.mxu0 0.0
    %1088 = vmatpush.msra.mxu0 0.0
    %1089 = vmatpush.msra.mxu0 0.0
    %1090 = vmatpush.msra.mxu0 %v351
    %1091 = vmatpush.msra.mxu0 %v350
    %1092 = vmatpush.msra.mxu0 %v349
    %1093 = vmatpush.msra.mxu0 %v348
    %1094 = vmatmul.f32.gmra.mxu0 %v1056
    %v1095 = vpop.f32.mrf.mxu0
    %v1096 = vadd.f32 0.0, %v1095
    %1097 = vdwg.mxu0
    %s1098 = scalar_lea.vmem [#allocation3], 12
    %v1099 = vld [vmem:[%s1098] sm:$0x3]
    %v1100 = vadd.f32 %v1099, %v1076
    %v1101 = vxor.u32 %v1100, 2147483648
    %v1102 = vmul.f32 %v1101, 1.442695
    %v1103 = vpow.pop %v1102
    %v1104 = vadd.f32 %v1103, 1.0
    %v1105 = vrcp.pop %v1104
    %v1106 = vmul.f32 %v1104, %v1105
    %v1107 = vsub.f32 1.0, %v1106
    %v1108 = vmul.f32 %v1105, %v1107
    %v1109 = vadd.f32 %v1105, %v1108
    %vm1110 = vweird.f32 %v1104
    %vm1111 = vweird.f32 %v1105
    %vm1112 = vmor %vm1110, %vm1111
    %v1113 = vsel %vm1112, %v1105, %v1109
    %v1114 = vand.u32 2147483647, %v1104
    %vm1115 = vcmp.eq.f32.partialorder %v1114, 8.507059e+37
    %v1116 = vand.u32 %v1104, 2147483648
    %v1117 = vor.u32 1.1754944e-38, %v1116
    %v1118 = vsel %vm1115, %v1117, %v1113
    %v1119 = vmul.f32 1.0, %v1118
    %s1120 = scalar_lea.vmem [#allocation4], 12
    %v1121 = vld [vmem:[%s1120] sm:$0x3]
    %v1122 = vadd.f32 %v1121, %v1096
    %v1123 = vxor.u32 %v1122, 2147483648
    %v1124 = vmul.f32 %v1123, 1.442695
    %v1125 = vpow.pop %v1124
    %v1126 = vadd.f32 %v1125, 1.0
    %v1127 = vrcp.pop %v1126
    %v1128 = vmul.f32 %v1126, %v1127
    %v1129 = vsub.f32 1.0, %v1128
    %v1130 = vmul.f32 %v1127, %v1129
    %v1131 = vadd.f32 %v1127, %v1130
    %vm1132 = vweird.f32 %v1126
    %vm1133 = vweird.f32 %v1127
    %vm1134 = vmor %vm1132, %vm1133
    %v1135 = vsel %vm1134, %v1127, %v1131
    %v1136 = vand.u32 2147483647, %v1126
    %vm1137 = vcmp.eq.f32.partialorder %v1136, 8.507059e+37
    %v1138 = vand.u32 %v1126, 2147483648
    %v1139 = vor.u32 1.1754944e-38, %v1138
    %v1140 = vsel %vm1137, %v1139, %v1135
    %v1141 = vmul.f32 1.0, %v1140
    %s1142 = scalar_lea.vmem [#allocation5], 12
    %v1143 = vld [vmem:[%s1142] sm:$0x3]
    %1144 = vmatpush.msra.mxu0 0.0
    %1145 = vmatpush.msra.mxu0 0.0
    %1146 = vmatpush.msra.mxu0 0.0
    %1147 = vmatpush.msra.mxu0 0.0
    %1148 = vmatpush.msra.mxu0 0.0
    %1149 = vmatpush.msra.mxu0 0.0
    %1150 = vmatpush.msra.mxu0 0.0
    %1151 = vmatpush.msra.mxu0 0.0
    %1152 = vmatpush.msra.mxu0 0.0
    %1153 = vmatpush.msra.mxu0 0.0
    %1154 = vmatpush.msra.mxu0 0.0
    %1155 = vmatpush.msra.mxu0 0.0
    %1156 = vmatpush.msra.mxu0 %v356
    %1157 = vmatpush.msra.mxu0 %v355
    %1158 = vmatpush.msra.mxu0 %v354
    %1159 = vmatpush.msra.mxu0 %v353
    %1160 = vmatmul.f32.gmra.mxu0 %v1056
    %v1161 = vpop.f32.mrf.mxu0
    %v1162 = vadd.f32 %v446, %v1161
    %1163 = vdwg.mxu0
    %v1164 = vmul.f32 %v1119, %v1162
    %v1165 = vadd.f32 %v1143, %v1164
    %v1166 = vtanh.pop %v1165
    %v1167 = vsub.f32 1.0, %v1141
    %v1168 = vmul.f32 %v1167, %v1166
    %v1169 = vmul.f32 %v1141, %v1054
    %v1170 = vadd.f32 %v1168, %v1169
    %v1172 = vsel %vm358, %v1170, 0
    %1174 = vmatpush.msra.mxu0 0.0
    %1175 = vmatpush.msra.mxu0 0.0
    %1176 = vmatpush.msra.mxu0 0.0
    %1177 = vmatpush.msra.mxu0 0.0
    %1178 = vmatpush.msra.mxu0 0.0
    %1179 = vmatpush.msra.mxu0 0.0
    %1180 = vmatpush.msra.mxu0 0.0
    %1181 = vmatpush.msra.mxu0 0.0
    %1182 = vmatpush.msra.mxu0 0.0
    %1183 = vmatpush.msra.mxu0 0.0
    %1184 = vmatpush.msra.mxu0 0.0
    %1185 = vmatpush.msra.mxu0 0.0
    %1186 = vmatpush.msra.mxu0 %v346
    %1187 = vmatpush.msra.mxu0 %v345
    %1188 = vmatpush.msra.mxu0 %v344
    %1189 = vmatpush.msra.mxu0 %v343
    %1190 = vmatmul.f32.gmra.mxu0 %v1172
    %v1191 = vpop.f32.mrf.mxu0
    %v1192 = vadd.f32 0.0, %v1191
    %1193 = vdwg.mxu0
    %1194 = vmatpush.msra.mxu0 0.0
    %1195 = vmatpush.msra.mxu0 0.0
    %1196 = vmatpush.msra.mxu0 0.0
    %1197 = vmatpush.msra.mxu0 0.0
    %1198 = vmatpush.msra.mxu0 0.0
    %1199 = vmatpush.msra.mxu0 0.0
    %1200 = vmatpush.msra.mxu0 0.0
    %1201 = vmatpush.msra.mxu0 0.0
    %1202 = vmatpush.msra.mxu0 0.0
    %1203 = vmatpush.msra.mxu0 0.0
    %1204 = vmatpush.msra.mxu0 0.0
    %1205 = vmatpush.msra.mxu0 0.0
    %1206 = vmatpush.msra.mxu0 %v351
    %1207 = vmatpush.msra.mxu0 %v350
    %1208 = vmatpush.msra.mxu0 %v349
    %1209 = vmatpush.msra.mxu0 %v348
    %1210 = vmatmul.f32.gmra.mxu0 %v1172
    %v1211 = vpop.f32.mrf.mxu0
    %v1212 = vadd.f32 0.0, %v1211
    %1213 = vdwg.mxu0
    %s1214 = scalar_lea.vmem [#allocation3], 14
    %v1215 = vld [vmem:[%s1214] sm:$0x3]
    %v1216 = vadd.f32 %v1215, %v1192
    %v1217 = vxor.u32 %v1216, 2147483648
    %v1218 = vmul.f32 %v1217, 1.442695
    %v1219 = vpow.pop %v1218
    %v1220 = vadd.f32 %v1219, 1.0
    %v1221 = vrcp.pop %v1220
    %v1222 = vmul.f32 %v1220, %v1221
    %v1223 = vsub.f32 1.0, %v1222
    %v1224 = vmul.f32 %v1221, %v1223
    %v1225 = vadd.f32 %v1221, %v1224
    %vm1226 = vweird.f32 %v1220
    %vm1227 = vweird.f32 %v1221
    %vm1228 = vmor %vm1226, %vm1227
    %v1229 = vsel %vm1228, %v1221, %v1225
    %v1230 = vand.u32 2147483647, %v1220
    %vm1231 = vcmp.eq.f32.partialorder %v1230, 8.507059e+37
    %v1232 = vand.u32 %v1220, 2147483648
    %v1233 = vor.u32 1.1754944e-38, %v1232
    %v1234 = vsel %vm1231, %v1233, %v1229
    %v1235 = vmul.f32 1.0, %v1234
    %s1236 = scalar_lea.vmem [#allocation4], 14
    %v1237 = vld [vmem:[%s1236] sm:$0x3]
    %v1238 = vadd.f32 %v1237, %v1212
    %v1239 = vxor.u32 %v1238, 2147483648
    %v1240 = vmul.f32 %v1239, 1.442695
    %v1241 = vpow.pop %v1240
    %v1242 = vadd.f32 %v1241, 1.0
    %v1243 = vrcp.pop %v1242
    %v1244 = vmul.f32 %v1242, %v1243
    %v1245 = vsub.f32 1.0, %v1244
    %v1246 = vmul.f32 %v1243, %v1245
    %v1247 = vadd.f32 %v1243, %v1246
    %vm1248 = vweird.f32 %v1242
    %vm1249 = vweird.f32 %v1243
    %vm1250 = vmor %vm1248, %vm1249
    %v1251 = vsel %vm1250, %v1243, %v1247
    %v1252 = vand.u32 2147483647, %v1242
    %vm1253 = vcmp.eq.f32.partialorder %v1252, 8.507059e+37
    %v1254 = vand.u32 %v1242, 2147483648
    %v1255 = vor.u32 1.1754944e-38, %v1254
    %v1256 = vsel %vm1253, %v1255, %v1251
    %v1257 = vmul.f32 1.0, %v1256
    %s1258 = scalar_lea.vmem [#allocation5], 14
    %v1259 = vld [vmem:[%s1258] sm:$0x3]
    %1260 = vmatpush.msra.mxu0 0.0
    %1261 = vmatpush.msra.mxu0 0.0
    %1262 = vmatpush.msra.mxu0 0.0
    %1263 = vmatpush.msra.mxu0 0.0
    %1264 = vmatpush.msra.mxu0 0.0
    %1265 = vmatpush.msra.mxu0 0.0
    %1266 = vmatpush.msra.mxu0 0.0
    %1267 = vmatpush.msra.mxu0 0.0
    %1268 = vmatpush.msra.mxu0 0.0
    %1269 = vmatpush.msra.mxu0 0.0
    %1270 = vmatpush.msra.mxu0 0.0
    %1271 = vmatpush.msra.mxu0 0.0
    %1272 = vmatpush.msra.mxu0 %v356
    %1273 = vmatpush.msra.mxu0 %v355
    %1274 = vmatpush.msra.mxu0 %v354
    %1275 = vmatpush.msra.mxu0 %v353
    %1276 = vmatmul.f32.gmra.mxu0 %v1172
    %v1277 = vpop.f32.mrf.mxu0
    %v1278 = vadd.f32 %v446, %v1277
    %1279 = vdwg.mxu0
    %v1280 = vmul.f32 %v1235, %v1278
    %v1281 = vadd.f32 %v1259, %v1280
    %v1282 = vtanh.pop %v1281
    %v1283 = vsub.f32 1.0, %v1257
    %v1284 = vmul.f32 %v1283, %v1282
    %v1285 = vmul.f32 %v1257, %v1170
    %v1286 = vadd.f32 %v1284, %v1285
    %1287 = vst.msk [vmem:[#allocation2] sm:$0x3] %vm181, %v1286
    // Predicated region
    $region38: #{tpu_custom_call.1} parent=1 // pred_check
      %p1288 = pneg %p44
    $region39: #{tpu_custom_call.1} parent=1 // pred_check_branch
      %1290 = sbr.rel (%p1288) target = $region41
    $region40: #{tpu_custom_call.1} parent=1 // pred_region
      %v1291 = vld [vmem:[%s5] sm:$0x1]
      %v1293 = vperm.slane %v1291, 0
      %v1295 = vmul.f32 %v1286, %v1293
      %v1296 = vsel %vm181, %v1295, 0.0
      %1297 = vadd.xlane.f32.xlu0 %v1296
      %v1298 = vpop.xlane.xlu0 %1297
      %v1299 = vld [vmem:[#allocation6] sm:$0x1]
      %v1301 = vperm.slane %v1299, 0
      %v1303 = vadd.f32 %v1298, %v1301
      %v1304 = vxor.u32 %v1303, 2147483648
      %v1305 = vmul.f32 %v1304, 1.442695
      %v1306 = vpow.pop %v1305
      %v1307 = vadd.f32 %v1306, 1.0
      %v1308 = vrcp.pop %v1307
      %v1309 = vmul.f32 %v1307, %v1308
      %v1310 = vsub.f32 1.0, %v1309
      %v1311 = vmul.f32 %v1308, %v1310
      %v1312 = vadd.f32 %v1308, %v1311
      %vm1313 = vweird.f32 %v1307
      %vm1314 = vweird.f32 %v1308
      %vm1315 = vmor %vm1313, %vm1314
      %v1316 = vsel %vm1315, %v1308, %v1312
      %v1317 = vand.u32 2147483647, %v1307
      %vm1318 = vcmp.eq.f32.partialorder %v1317, 8.507059e+37
      %v1319 = vand.u32 %v1307, 2147483648
      %v1320 = vor.u32 1.1754944e-38, %v1319
      %v1321 = vsel %vm1318, %v1320, %v1316
      %v1322 = vmul.f32 1.0, %v1321
      %vm1323 = vcmask 1024
      %1324 = vst.msk [vmem:[%s7] sm:$0x3] %vm1323, %v1322
    $region41: #{tpu_custom_call.1} parent=1 // pred_fallthru
      _
    // Predicated region
    $region42: #{tpu_custom_call.1} parent=1 // pred_check
      _
    $region43: #{tpu_custom_call.1} parent=1 // pred_check_branch
      %1326 = sbr.rel (0) target = $region45
    $region44: #{tpu_custom_call.1} parent=1 // pred_region
      _
    $region45: #{tpu_custom_call.1} parent=1 // pred_fallthru
      _
    // Predicated region
    $region46: #{tpu_custom_call.1} parent=1 // pred_check
      _
    $region47: #{tpu_custom_call.1} parent=1 // pred_check_branch
      %1328 = sbr.rel (0) target = $region49
    $region48: #{tpu_custom_call.1} parent=1 // pred_region
      _
    $region49: #{tpu_custom_call.1} parent=1 // pred_fallthru
      _
    %1329 = vsyncpa [#allocation8], 1

</llo_original>
